<compile_context>
chip_gen: v6e
topology: v6e:2x2x1
jax: 0.10.0
libtpu: 0.0.40
codegen_flags: <defaults>
</compile_context>

<pallas_src>
import jax
import jax.numpy as jnp
from jax.experimental import pallas as pl
from jax.experimental.pallas import tpu as pltpu

# ---------------- model dimensions (small, deterministic) ----------------
B = 2        # batch
S = 8        # sequence length
D = 32       # model size
H = 4        # attention heads
DH = D // H  # per-head dim
D_FF = 64    # feed-forward hidden
EPS = 1e-5   # torch.nn.LayerNorm default

R = B * S          # rows per stream when the batch is folded into the block
D3 = 3 * D         # fused q|k|v width (also the packed-slab lane width)


def _layernorm(x, g, b):
    # x: (N, D), g/b: (1, D).  Biased variance, matching torch.nn.LayerNorm.
    mu = jnp.mean(x, axis=-1, keepdims=True)
    var = jnp.mean(jnp.square(x - mu), axis=-1, keepdims=True)
    return (x - mu) * jax.lax.rsqrt(var + EPS) * g + b


def transformer_layer_kernel(x_ref, w_ref, vec_ref, o_ref):
    # x_ref  : (3*R, D)   rows [0:R]=q, [R:2R]=k, [2R:3R]=v  (each in (b, s) order)
    # w_ref  : (4, D, 3D) [ wq|wk|wv fused , wo(pad) , w1(pad) , w2^T(pad) ]
    # vec_ref: (10, 3D)   packed bias / gamma / beta rows (zero padded to 3D lanes)
    # o_ref  : (B, S, D)

    vecs = vec_ref[...]                      # (10, 3D); offset-0 lane slices are cheap
    bqkv = vecs[0:1, :]                      # (1, 3D)  fused bq|bk|bv
    norm_g, norm_b = vecs[1:2, :D], vecs[2:3, :D]
    ln0_g, ln0_b = vecs[3:4, :D], vecs[4:5, :D]
    ln1_g, ln1_b = vecs[5:6, :D], vecs[6:7, :D]
    bo = vecs[7:8, :D]
    b1 = vecs[8:9, :D_FF]
    b2 = vecs[9:10, :D]

    # --- shared input LayerNorm, all three streams at once (one reduction chain) ---
    x_all = x_ref[...]                                   # (3R, D)
    xn = _layernorm(x_all, norm_g, norm_b)               # (3R, D)

    # --- fused Q/K/V projection: one MXU matmul; only diagonal blocks are read ---
    proj = jnp.dot(xn, w_ref[0], preferred_element_type=jnp.float32) + bqkv  # (3R, 3D)

    qn = xn[0:R]                                          # (R, D) residual for sublayer 0
    q_rows = proj[0:R] * (1.0 / (DH ** 0.5))              # softmax scale folded in once
    k_rows = proj[R:2 * R]
    v_rows = proj[2 * R:3 * R]

    wo = w_ref[1][:, :D]                                  # (D, D)

    # --- multi-head attention; out-projection + bo folded into the accumulator ---
    acc = qn + bo                                         # (R, D) f32
    for h in range(H):                                    # static unroll, H = 4
        lo = h * DH
        qh = q_rows[:, lo:lo + DH].reshape(B, S, DH)
        kh = k_rows[:, D + lo:D + lo + DH].reshape(B, S, DH)
        vh = v_rows[:, 2 * D + lo:2 * D + lo + DH].reshape(B, S, DH)
        # contract last dims of both operands -> no explicit transpose of kh
        s = jnp.einsum('bqd,bkd->bqk', qh, kh, preferred_element_type=jnp.float32)
        s = s - jnp.max(s, axis=-1, keepdims=True)
        p = jnp.exp(s)
        p = p * pl.reciprocal(jnp.sum(p, axis=-1, keepdims=True), approx=True)
        oh = jnp.einsum('bqk,bkd->bqd', p, vh, preferred_element_type=jnp.float32)
        acc = acc + jnp.dot(oh.reshape(R, DH), wo[lo:lo + DH, :],
                            preferred_element_type=jnp.float32)

    # --- sublayer[0]: x = LN0(qn + attn)   (dropout == identity) ---
    x = _layernorm(acc, ln0_g, ln0_b)                     # (R, D)

    # --- feed forward:  relu(x @ w1 + b1) @ w2 + b2  (w2 stored transposed) ---
    w1 = w_ref[2][:, :D_FF]                               # (D, D_FF)
    w2t = w_ref[3][:, :D_FF]                              # (D, D_FF) == w2^T
    h1 = jnp.maximum(jnp.dot(x, w1, preferred_element_type=jnp.float32) + b1, 0.0)
    ff = jax.lax.dot_general(h1, w2t, (((1,), (1,)), ((), ())),
                             preferred_element_type=jnp.float32) + b2

    # --- sublayer[1]: out = LN1(x + ff) ---
    out = _layernorm(x + ff, ln1_g, ln1_b)                # (R, D)
    o_ref[...] = out.reshape(B, S, D)


def _pad_cols(a, width):
    return jnp.pad(a, ((0, 0), (0, width - a.shape[1])))


def pack_params(p):
    """Pack the 18 parameter tensors into one weight slab and one vector slab."""
    wqkv = jnp.concatenate([p["wq"], p["wk"], p["wv"]], axis=1)      # (D, 3D)
    bqkv = jnp.concatenate([p["bq"], p["bk"], p["bv"]], axis=1)      # (1, 3D)
    wmats = jnp.stack([
        wqkv,                                                        # (D, 3D)
        _pad_cols(p["wo"], D3),                                      # wo   (D, D) padded
        _pad_cols(p["w1"], D3),                                      # w1   (D, D_FF) padded
        _pad_cols(p["w2"].T, D3),                                    # w2^T (D, D_FF) padded
    ])                                                               # (4, D, 3D)
    pvecs = jnp.concatenate([
        bqkv,
        _pad_cols(p["norm_g"], D3), _pad_cols(p["norm_b"], D3),
        _pad_cols(p["ln0_g"], D3), _pad_cols(p["ln0_b"], D3),
        _pad_cols(p["ln1_g"], D3), _pad_cols(p["ln1_b"], D3),
        _pad_cols(p["bo"], D3),
        _pad_cols(p["b1"], D3),
        _pad_cols(p["b2"], D3),
    ], axis=0)                                                       # (10, 3D)
    return wmats.astype(jnp.float32), pvecs.astype(jnp.float32)


def transformer_layer(q, k, v, params):
    """q, k, v: (B, S, D) float32.  params: dict of weights (see init_params)."""
    Bz, Sz, Dz = q.shape
    # Stack the three streams into one lane-contiguous slab: 1 input DMA.
    x_in = jnp.stack([q, k, v]).reshape(3 * Bz * Sz, Dz)
    wmats, pvecs = pack_params(params)

    return pl.pallas_call(
        transformer_layer_kernel,
        out_shape=jax.ShapeDtypeStruct((Bz, Sz, Dz), jnp.float32),
        grid_spec=pltpu.PrefetchScalarGridSpec(
            num_scalar_prefetch=0,
            grid=(1,),  # single step: whole (tiny) batch in one block (best on v5e/v6e)
            in_specs=[
                pl.BlockSpec(x_in.shape, lambda i: (0, 0)),
                pl.BlockSpec(wmats.shape, lambda i: (0, 0, 0)),
                pl.BlockSpec(pvecs.shape, lambda i: (0, 0)),
            ],
            out_specs=pl.BlockSpec((Bz, Sz, Dz), lambda i: (0, 0, 0)),
        ),
        compiler_params=pltpu.CompilerParams(
            dimension_semantics=("arbitrary",)),
    )(x_in, wmats, pvecs)


def init_params(key):
    ks = jax.random.split(key, 12)
    std = 0.05
    p = {
        # shared input LayerNorm
        "norm_g": jnp.ones((1, D), jnp.float32) + std * jax.random.normal(ks[0], (1, D)),
        "norm_b": std * jax.random.normal(ks[1], (1, D)),
        # attention projections
        "wq": std * jax.random.normal(ks[2], (D, D)),
        "bq": std * jax.random.normal(ks[3], (1, D)),
        "wk": std * jax.random.normal(ks[4], (D, D)),
        "bk": std * jax.random.normal(ks[5], (1, D)),
        "wv": std * jax.random.normal(ks[6], (D, D)),
        "bv": std * jax.random.normal(ks[7], (1, D)),
        "wo": std * jax.random.normal(ks[8], (D, D)),
        "bo": std * jax.random.normal(ks[9], (1, D)),
        # sublayer LayerNorms
        "ln0_g": jnp.ones((1, D), jnp.float32),
        "ln0_b": jnp.zeros((1, D), jnp.float32),
        "ln1_g": jnp.ones((1, D), jnp.float32),
        "ln1_b": jnp.zeros((1, D), jnp.float32),
        # feed forward
        "w1": std * jax.random.normal(ks[10], (D, D_FF)),
        "b1": jnp.zeros((1, D_FF), jnp.float32),
        "w2": std * jax.random.normal(ks[11], (D_FF, D)),
        "b2": jnp.zeros((1, D), jnp.float32),
    }
    return jax.tree_util.tree_map(lambda a: a.astype(jnp.float32), p)


# ------------------------ pure-JAX reference ------------------------
def _ref_forward(q, k, v, p):
    def ln(x, g, b):
        mu = jnp.mean(x, axis=-1, keepdims=True)
        var = jnp.mean((x - mu) ** 2, axis=-1, keepdims=True)
        return (x - mu) / jnp.sqrt(var + EPS) * g + b

    qn = ln(q, p["norm_g"], p["norm_b"])
    kn = ln(k, p["norm_g"], p["norm_b"])
    vn = ln(v, p["norm_g"], p["norm_b"])
    qp = qn @ p["wq"] + p["bq"]
    kp = kn @ p["wk"] + p["bk"]
    vp = vn @ p["wv"] + p["bv"]

    def split_heads(x):  # (B,S,D) -> (B,H,S,DH)
        return x.reshape(B, S, H, DH).transpose(0, 2, 1, 3)

    qh, kh, vh = split_heads(qp), split_heads(kp), split_heads(vp)
    scores = jnp.einsum("bhqd,bhkd->bhqk", qh, kh) / (DH ** 0.5)
    w = jax.nn.softmax(scores, axis=-1)
    attn = jnp.einsum("bhqk,bhkd->bhqd", w, vh).transpose(0, 2, 1, 3).reshape(B, S, D)
    attn = attn @ p["wo"] + p["bo"]

    x = ln(qn + attn, p["ln0_g"], p["ln0_b"])
    ff = jnp.maximum(x @ p["w1"] + p["b1"], 0.0) @ p["w2"] + p["b2"]
    return ln(x + ff, p["ln1_g"], p["ln1_b"])


if __name__ == "__main__":
    key = jax.random.PRNGKey(0)
    kq, kk, kv, kp = jax.random.split(key, 4)
    q = jax.random.normal(kq, (B, S, D), jnp.float32)
    k = jax.random.normal(kk, (B, S, D), jnp.float32)
    v = jax.random.normal(kv, (B, S, D), jnp.float32)
    params = init_params(kp)

    out = transformer_layer(q, k, v, params)
    out = jax.block_until_ready(out)

    ref = _ref_forward(q, k, v, params)
    assert out.shape == (B, S, D)
    # 2e-3 tolerance accommodates the approx (EUP) reciprocal in the softmax.
    assert jnp.allclose(out, ref, rtol=2e-3, atol=2e-3), "mismatch vs pure-JAX reference"

    print("KERNEL_OK")
</pallas_src>

<mosaic_0001>
module attributes {stable_mosaic.version = 11 : i64} {
  func.func @transformer_layer_kernel(%arg0: i32, %arg1: memref<48x32xf32, #tpu.memory_space<vmem>>, %arg2: memref<4x32x96xf32, #tpu.memory_space<vmem>>, %arg3: memref<10x96xf32, #tpu.memory_space<vmem>>, %arg4: memref<2x8x32xf32, #tpu.memory_space<vmem>>) attributes {dimension_semantics = [#tpu.dimension_semantics<arbitrary>], iteration_bounds = array<i64: 1>, scalar_prefetch = 0 : i64, scratch_operands = 0 : i64, tpu.core_type = #tpu.core_type<tc>, window_params = [{pipeline_mode = #tpu.pipeline_mode<synchronous>, transform_indices = @transform_0, window_bounds = array<i64: 48, 32>}, {pipeline_mode = #tpu.pipeline_mode<synchronous>, transform_indices = @transform_1, window_bounds = array<i64: 4, 32, 96>}, {pipeline_mode = #tpu.pipeline_mode<synchronous>, transform_indices = @transform_2, window_bounds = array<i64: 10, 96>}, {pipeline_mode = #tpu.pipeline_mode<synchronous>, transform_indices = @transform_3, window_bounds = array<i64: 2, 8, 32>}]} {
    %c0 = arith.constant 0 : index
    %c0_0 = arith.constant 0 : index
    %0 = vector.load %arg3[%c0, %c0_0] : memref<10x96xf32, #tpu.memory_space<vmem>>, vector<10x96xf32>
    %1 = vector.extract_strided_slice %0 {offsets = [0, 0], sizes = [1, 96], strides = [1, 1]} : vector<10x96xf32> to vector<1x96xf32>
    %2 = vector.extract_strided_slice %0 {offsets = [1, 0], sizes = [1, 32], strides = [1, 1]} : vector<10x96xf32> to vector<1x32xf32>
    %3 = vector.extract_strided_slice %0 {offsets = [2, 0], sizes = [1, 32], strides = [1, 1]} : vector<10x96xf32> to vector<1x32xf32>
    %4 = vector.extract_strided_slice %0 {offsets = [3, 0], sizes = [1, 32], strides = [1, 1]} : vector<10x96xf32> to vector<1x32xf32>
    %5 = vector.extract_strided_slice %0 {offsets = [4, 0], sizes = [1, 32], strides = [1, 1]} : vector<10x96xf32> to vector<1x32xf32>
    %6 = vector.extract_strided_slice %0 {offsets = [5, 0], sizes = [1, 32], strides = [1, 1]} : vector<10x96xf32> to vector<1x32xf32>
    %7 = vector.extract_strided_slice %0 {offsets = [6, 0], sizes = [1, 32], strides = [1, 1]} : vector<10x96xf32> to vector<1x32xf32>
    %8 = vector.extract_strided_slice %0 {offsets = [7, 0], sizes = [1, 32], strides = [1, 1]} : vector<10x96xf32> to vector<1x32xf32>
    %9 = vector.extract_strided_slice %0 {offsets = [8, 0], sizes = [1, 64], strides = [1, 1]} : vector<10x96xf32> to vector<1x64xf32>
    %10 = vector.extract_strided_slice %0 {offsets = [9, 0], sizes = [1, 32], strides = [1, 1]} : vector<10x96xf32> to vector<1x32xf32>
    %c0_1 = arith.constant 0 : index
    %c0_2 = arith.constant 0 : index
    %11 = vector.load %arg1[%c0_1, %c0_2] : memref<48x32xf32, #tpu.memory_space<vmem>>, vector<48x32xf32>
    %cst = arith.constant dense<0.000000e+00> : vector<48xf32>
    %12 = vector.multi_reduction <add>, %11, %cst [1] : vector<48x32xf32> to vector<48xf32>
    %13 = vector.shape_cast %12 : vector<48xf32> to vector<48x1xf32>
    %cst_3 = arith.constant 3.200000e+01 : f32
    %14 = vector.broadcast %cst_3 : f32 to vector<48x1xf32>
    %15 = arith.divf %13, %14 : vector<48x1xf32>
    %16 = vector.broadcast %15 : vector<48x1xf32> to vector<48x32xf32>
    %17 = arith.subf %11, %16 : vector<48x32xf32>
    %18 = arith.mulf %17, %17 : vector<48x32xf32>
    %cst_4 = arith.constant dense<0.000000e+00> : vector<48xf32>
    %19 = vector.multi_reduction <add>, %18, %cst_4 [1] : vector<48x32xf32> to vector<48xf32>
    %20 = vector.shape_cast %19 : vector<48xf32> to vector<48x1xf32>
    %cst_5 = arith.constant 3.200000e+01 : f32
    %21 = vector.broadcast %cst_5 : f32 to vector<48x1xf32>
    %22 = arith.divf %20, %21 : vector<48x1xf32>
    %23 = vector.broadcast %15 : vector<48x1xf32> to vector<48x32xf32>
    %24 = arith.subf %11, %23 : vector<48x32xf32>
    %cst_6 = arith.constant 9.99999974E-6 : f32
    %25 = vector.broadcast %cst_6 : f32 to vector<48x1xf32>
    %26 = arith.addf %22, %25 : vector<48x1xf32>
    %27 = math.rsqrt %26 : vector<48x1xf32>
    %28 = vector.broadcast %27 : vector<48x1xf32> to vector<48x32xf32>
    %29 = arith.mulf %24, %28 : vector<48x32xf32>
    %30 = vector.broadcast %2 : vector<1x32xf32> to vector<48x32xf32>
    %31 = arith.mulf %29, %30 : vector<48x32xf32>
    %32 = vector.broadcast %3 : vector<1x32xf32> to vector<48x32xf32>
    %33 = arith.addf %31, %32 : vector<48x32xf32>
    %c0_7 = arith.constant 0 : index
    %c0_8 = arith.constant 0 : index
    %c0_9 = arith.constant 0 : index
    %34 = vector.load %arg2[%c0_7, %c0_8, %c0_9] : memref<4x32x96xf32, #tpu.memory_space<vmem>>, vector<1x32x96xf32>
    %35 = vector.shape_cast %34 : vector<1x32x96xf32> to vector<32x96xf32>
    %cst_10 = arith.constant dense<0.000000e+00> : vector<48x96xf32>
    %36 = tpu.matmul %33, %35, %cst_10 {dimension_numbers = #tpu.dot_dimension_numbers<[1], [0], [0], [1], [0, 0, 1, 1], [], []>} : vector<48x32xf32>, vector<32x96xf32>, vector<48x96xf32> -> vector<48x96xf32>
    %37 = vector.broadcast %1 : vector<1x96xf32> to vector<48x96xf32>
    %38 = arith.addf %36, %37 : vector<48x96xf32>
    %39 = vector.extract_strided_slice %33 {offsets = [0, 0], sizes = [16, 32], strides = [1, 1]} : vector<48x32xf32> to vector<16x32xf32>
    %40 = vector.extract_strided_slice %38 {offsets = [0, 0], sizes = [16, 96], strides = [1, 1]} : vector<48x96xf32> to vector<16x96xf32>
    %cst_11 = arith.constant 0.353553385 : f32
    %41 = vector.broadcast %cst_11 : f32 to vector<16x96xf32>
    %42 = arith.mulf %40, %41 : vector<16x96xf32>
    %43 = vector.extract_strided_slice %38 {offsets = [16, 0], sizes = [16, 96], strides = [1, 1]} : vector<48x96xf32> to vector<16x96xf32>
    %44 = vector.extract_strided_slice %38 {offsets = [32, 0], sizes = [16, 96], strides = [1, 1]} : vector<48x96xf32> to vector<16x96xf32>
    %c1 = arith.constant 1 : index
    %c0_12 = arith.constant 0 : index
    %c0_13 = arith.constant 0 : index
    %45 = vector.load %arg2[%c1, %c0_12, %c0_13] : memref<4x32x96xf32, #tpu.memory_space<vmem>>, vector<1x32x96xf32>
    %46 = vector.shape_cast %45 : vector<1x32x96xf32> to vector<32x96xf32>
    %47 = vector.extract_strided_slice %46 {offsets = [0, 0], sizes = [32, 32], strides = [1, 1]} : vector<32x96xf32> to vector<32x32xf32>
    %48 = vector.broadcast %8 : vector<1x32xf32> to vector<16x32xf32>
    %49 = arith.addf %39, %48 : vector<16x32xf32>
    %50 = vector.extract_strided_slice %42 {offsets = [0, 0], sizes = [16, 8], strides = [1, 1]} : vector<16x96xf32> to vector<16x8xf32>
    %51 = vector.shape_cast %50 : vector<16x8xf32> to vector<2x8x8xf32>
    %52 = vector.extract_strided_slice %43 {offsets = [0, 32], sizes = [16, 8], strides = [1, 1]} : vector<16x96xf32> to vector<16x8xf32>
    %53 = vector.shape_cast %52 : vector<16x8xf32> to vector<2x8x8xf32>
    %54 = vector.extract_strided_slice %44 {offsets = [0, 64], sizes = [16, 8], strides = [1, 1]} : vector<16x96xf32> to vector<16x8xf32>
    %55 = vector.shape_cast %54 : vector<16x8xf32> to vector<2x8x8xf32>
    "tpu.trace_start"() <{level = 10 : i32, message = "bqd,bkd->bqk"}> : () -> ()
    %cst_14 = arith.constant dense<0.000000e+00> : vector<2x8x8xf32>
    %56 = tpu.matmul %51, %53, %cst_14 {dimension_numbers = #tpu.dot_dimension_numbers<[2], [2], [1], [1], [0, 0, 0, 1, 1, 1], [0], [0]>} : vector<2x8x8xf32>, vector<2x8x8xf32>, vector<2x8x8xf32> -> vector<2x8x8xf32>
    "tpu.trace_stop"() : () -> ()
    %cst_15 = arith.constant dense<0xFF800000> : vector<2x8xf32>
    %57 = vector.multi_reduction <maximumf>, %56, %cst_15 [2] : vector<2x8x8xf32> to vector<2x8xf32>
    %58 = vector.shape_cast %57 : vector<2x8xf32> to vector<2x8x1xf32>
    %59 = vector.broadcast %58 : vector<2x8x1xf32> to vector<2x8x8xf32>
    %60 = arith.subf %56, %59 : vector<2x8x8xf32>
    %61 = math.exp %60 : vector<2x8x8xf32>
    %cst_16 = arith.constant dense<0.000000e+00> : vector<2x8xf32>
    %62 = vector.multi_reduction <add>, %61, %cst_16 [2] : vector<2x8x8xf32> to vector<2x8xf32>
    %63 = vector.shape_cast %62 : vector<2x8xf32> to vector<2x8x1xf32>
    %64 = tpu.reciprocal %63 {approx = true} : vector<2x8x1xf32> -> vector<2x8x1xf32>
    %65 = vector.broadcast %64 : vector<2x8x1xf32> to vector<2x8x8xf32>
    %66 = arith.mulf %61, %65 : vector<2x8x8xf32>
    "tpu.trace_start"() <{level = 10 : i32, message = "bqk,bkd->bqd"}> : () -> ()
    %cst_17 = arith.constant dense<0.000000e+00> : vector<2x8x8xf32>
    %67 = tpu.matmul %66, %55, %cst_17 {dimension_numbers = #tpu.dot_dimension_numbers<[2], [1], [1], [2], [0, 0, 0, 1, 1, 2], [0], [0]>} : vector<2x8x8xf32>, vector<2x8x8xf32>, vector<2x8x8xf32> -> vector<2x8x8xf32>
    "tpu.trace_stop"() : () -> ()
    %68 = vector.shape_cast %67 : vector<2x8x8xf32> to vector<16x8xf32>
    %69 = vector.extract_strided_slice %47 {offsets = [0, 0], sizes = [8, 32], strides = [1, 1]} : vector<32x32xf32> to vector<8x32xf32>
    %cst_18 = arith.constant dense<0.000000e+00> : vector<16x32xf32>
    %70 = tpu.matmul %68, %69, %cst_18 {dimension_numbers = #tpu.dot_dimension_numbers<[1], [0], [0], [1], [0, 0, 1, 1], [], []>} : vector<16x8xf32>, vector<8x32xf32>, vector<16x32xf32> -> vector<16x32xf32>
    %71 = arith.addf %49, %70 : vector<16x32xf32>
    %72 = vector.extract_strided_slice %42 {offsets = [0, 8], sizes = [16, 8], strides = [1, 1]} : vector<16x96xf32> to vector<16x8xf32>
    %73 = vector.shape_cast %72 : vector<16x8xf32> to vector<2x8x8xf32>
    %74 = vector.extract_strided_slice %43 {offsets = [0, 40], sizes = [16, 8], strides = [1, 1]} : vector<16x96xf32> to vector<16x8xf32>
    %75 = vector.shape_cast %74 : vector<16x8xf32> to vector<2x8x8xf32>
    %76 = vector.extract_strided_slice %44 {offsets = [0, 72], sizes = [16, 8], strides = [1, 1]} : vector<16x96xf32> to vector<16x8xf32>
    %77 = vector.shape_cast %76 : vector<16x8xf32> to vector<2x8x8xf32>
    "tpu.trace_start"() <{level = 10 : i32, message = "bqd,bkd->bqk"}> : () -> ()
    %cst_19 = arith.constant dense<0.000000e+00> : vector<2x8x8xf32>
    %78 = tpu.matmul %73, %75, %cst_19 {dimension_numbers = #tpu.dot_dimension_numbers<[2], [2], [1], [1], [0, 0, 0, 1, 1, 1], [0], [0]>} : vector<2x8x8xf32>, vector<2x8x8xf32>, vector<2x8x8xf32> -> vector<2x8x8xf32>
    "tpu.trace_stop"() : () -> ()
    %cst_20 = arith.constant dense<0xFF800000> : vector<2x8xf32>
    %79 = vector.multi_reduction <maximumf>, %78, %cst_20 [2] : vector<2x8x8xf32> to vector<2x8xf32>
    %80 = vector.shape_cast %79 : vector<2x8xf32> to vector<2x8x1xf32>
    %81 = vector.broadcast %80 : vector<2x8x1xf32> to vector<2x8x8xf32>
    %82 = arith.subf %78, %81 : vector<2x8x8xf32>
    %83 = math.exp %82 : vector<2x8x8xf32>
    %cst_21 = arith.constant dense<0.000000e+00> : vector<2x8xf32>
    %84 = vector.multi_reduction <add>, %83, %cst_21 [2] : vector<2x8x8xf32> to vector<2x8xf32>
    %85 = vector.shape_cast %84 : vector<2x8xf32> to vector<2x8x1xf32>
    %86 = tpu.reciprocal %85 {approx = true} : vector<2x8x1xf32> -> vector<2x8x1xf32>
    %87 = vector.broadcast %86 : vector<2x8x1xf32> to vector<2x8x8xf32>
    %88 = arith.mulf %83, %87 : vector<2x8x8xf32>
    "tpu.trace_start"() <{level = 10 : i32, message = "bqk,bkd->bqd"}> : () -> ()
    %cst_22 = arith.constant dense<0.000000e+00> : vector<2x8x8xf32>
    %89 = tpu.matmul %88, %77, %cst_22 {dimension_numbers = #tpu.dot_dimension_numbers<[2], [1], [1], [2], [0, 0, 0, 1, 1, 2], [0], [0]>} : vector<2x8x8xf32>, vector<2x8x8xf32>, vector<2x8x8xf32> -> vector<2x8x8xf32>
    "tpu.trace_stop"() : () -> ()
    %90 = vector.shape_cast %89 : vector<2x8x8xf32> to vector<16x8xf32>
    %91 = vector.extract_strided_slice %47 {offsets = [8, 0], sizes = [8, 32], strides = [1, 1]} : vector<32x32xf32> to vector<8x32xf32>
    %cst_23 = arith.constant dense<0.000000e+00> : vector<16x32xf32>
    %92 = tpu.matmul %90, %91, %cst_23 {dimension_numbers = #tpu.dot_dimension_numbers<[1], [0], [0], [1], [0, 0, 1, 1], [], []>} : vector<16x8xf32>, vector<8x32xf32>, vector<16x32xf32> -> vector<16x32xf32>
    %93 = arith.addf %71, %92 : vector<16x32xf32>
    %94 = vector.extract_strided_slice %42 {offsets = [0, 16], sizes = [16, 8], strides = [1, 1]} : vector<16x96xf32> to vector<16x8xf32>
    %95 = vector.shape_cast %94 : vector<16x8xf32> to vector<2x8x8xf32>
    %96 = vector.extract_strided_slice %43 {offsets = [0, 48], sizes = [16, 8], strides = [1, 1]} : vector<16x96xf32> to vector<16x8xf32>
    %97 = vector.shape_cast %96 : vector<16x8xf32> to vector<2x8x8xf32>
    %98 = vector.extract_strided_slice %44 {offsets = [0, 80], sizes = [16, 8], strides = [1, 1]} : vector<16x96xf32> to vector<16x8xf32>
    %99 = vector.shape_cast %98 : vector<16x8xf32> to vector<2x8x8xf32>
    "tpu.trace_start"() <{level = 10 : i32, message = "bqd,bkd->bqk"}> : () -> ()
    %cst_24 = arith.constant dense<0.000000e+00> : vector<2x8x8xf32>
    %100 = tpu.matmul %95, %97, %cst_24 {dimension_numbers = #tpu.dot_dimension_numbers<[2], [2], [1], [1], [0, 0, 0, 1, 1, 1], [0], [0]>} : vector<2x8x8xf32>, vector<2x8x8xf32>, vector<2x8x8xf32> -> vector<2x8x8xf32>
    "tpu.trace_stop"() : () -> ()
    %cst_25 = arith.constant dense<0xFF800000> : vector<2x8xf32>
    %101 = vector.multi_reduction <maximumf>, %100, %cst_25 [2] : vector<2x8x8xf32> to vector<2x8xf32>
    %102 = vector.shape_cast %101 : vector<2x8xf32> to vector<2x8x1xf32>
    %103 = vector.broadcast %102 : vector<2x8x1xf32> to vector<2x8x8xf32>
    %104 = arith.subf %100, %103 : vector<2x8x8xf32>
    %105 = math.exp %104 : vector<2x8x8xf32>
    %cst_26 = arith.constant dense<0.000000e+00> : vector<2x8xf32>
    %106 = vector.multi_reduction <add>, %105, %cst_26 [2] : vector<2x8x8xf32> to vector<2x8xf32>
    %107 = vector.shape_cast %106 : vector<2x8xf32> to vector<2x8x1xf32>
    %108 = tpu.reciprocal %107 {approx = true} : vector<2x8x1xf32> -> vector<2x8x1xf32>
    %109 = vector.broadcast %108 : vector<2x8x1xf32> to vector<2x8x8xf32>
    %110 = arith.mulf %105, %109 : vector<2x8x8xf32>
    "tpu.trace_start"() <{level = 10 : i32, message = "bqk,bkd->bqd"}> : () -> ()
    %cst_27 = arith.constant dense<0.000000e+00> : vector<2x8x8xf32>
    %111 = tpu.matmul %110, %99, %cst_27 {dimension_numbers = #tpu.dot_dimension_numbers<[2], [1], [1], [2], [0, 0, 0, 1, 1, 2], [0], [0]>} : vector<2x8x8xf32>, vector<2x8x8xf32>, vector<2x8x8xf32> -> vector<2x8x8xf32>
    "tpu.trace_stop"() : () -> ()
    %112 = vector.shape_cast %111 : vector<2x8x8xf32> to vector<16x8xf32>
    %113 = vector.extract_strided_slice %47 {offsets = [16, 0], sizes = [8, 32], strides = [1, 1]} : vector<32x32xf32> to vector<8x32xf32>
    %cst_28 = arith.constant dense<0.000000e+00> : vector<16x32xf32>
    %114 = tpu.matmul %112, %113, %cst_28 {dimension_numbers = #tpu.dot_dimension_numbers<[1], [0], [0], [1], [0, 0, 1, 1], [], []>} : vector<16x8xf32>, vector<8x32xf32>, vector<16x32xf32> -> vector<16x32xf32>
    %115 = arith.addf %93, %114 : vector<16x32xf32>
    %116 = vector.extract_strided_slice %42 {offsets = [0, 24], sizes = [16, 8], strides = [1, 1]} : vector<16x96xf32> to vector<16x8xf32>
    %117 = vector.shape_cast %116 : vector<16x8xf32> to vector<2x8x8xf32>
    %118 = vector.extract_strided_slice %43 {offsets = [0, 56], sizes = [16, 8], strides = [1, 1]} : vector<16x96xf32> to vector<16x8xf32>
    %119 = vector.shape_cast %118 : vector<16x8xf32> to vector<2x8x8xf32>
    %120 = vector.extract_strided_slice %44 {offsets = [0, 88], sizes = [16, 8], strides = [1, 1]} : vector<16x96xf32> to vector<16x8xf32>
    %121 = vector.shape_cast %120 : vector<16x8xf32> to vector<2x8x8xf32>
    "tpu.trace_start"() <{level = 10 : i32, message = "bqd,bkd->bqk"}> : () -> ()
    %cst_29 = arith.constant dense<0.000000e+00> : vector<2x8x8xf32>
    %122 = tpu.matmul %117, %119, %cst_29 {dimension_numbers = #tpu.dot_dimension_numbers<[2], [2], [1], [1], [0, 0, 0, 1, 1, 1], [0], [0]>} : vector<2x8x8xf32>, vector<2x8x8xf32>, vector<2x8x8xf32> -> vector<2x8x8xf32>
    "tpu.trace_stop"() : () -> ()
    %cst_30 = arith.constant dense<0xFF800000> : vector<2x8xf32>
    %123 = vector.multi_reduction <maximumf>, %122, %cst_30 [2] : vector<2x8x8xf32> to vector<2x8xf32>
    %124 = vector.shape_cast %123 : vector<2x8xf32> to vector<2x8x1xf32>
    %125 = vector.broadcast %124 : vector<2x8x1xf32> to vector<2x8x8xf32>
    %126 = arith.subf %122, %125 : vector<2x8x8xf32>
    %127 = math.exp %126 : vector<2x8x8xf32>
    %cst_31 = arith.constant dense<0.000000e+00> : vector<2x8xf32>
    %128 = vector.multi_reduction <add>, %127, %cst_31 [2] : vector<2x8x8xf32> to vector<2x8xf32>
    %129 = vector.shape_cast %128 : vector<2x8xf32> to vector<2x8x1xf32>
    %130 = tpu.reciprocal %129 {approx = true} : vector<2x8x1xf32> -> vector<2x8x1xf32>
    %131 = vector.broadcast %130 : vector<2x8x1xf32> to vector<2x8x8xf32>
    %132 = arith.mulf %127, %131 : vector<2x8x8xf32>
    "tpu.trace_start"() <{level = 10 : i32, message = "bqk,bkd->bqd"}> : () -> ()
    %cst_32 = arith.constant dense<0.000000e+00> : vector<2x8x8xf32>
    %133 = tpu.matmul %132, %121, %cst_32 {dimension_numbers = #tpu.dot_dimension_numbers<[2], [1], [1], [2], [0, 0, 0, 1, 1, 2], [0], [0]>} : vector<2x8x8xf32>, vector<2x8x8xf32>, vector<2x8x8xf32> -> vector<2x8x8xf32>
    "tpu.trace_stop"() : () -> ()
    %134 = vector.shape_cast %133 : vector<2x8x8xf32> to vector<16x8xf32>
    %135 = vector.extract_strided_slice %47 {offsets = [24, 0], sizes = [8, 32], strides = [1, 1]} : vector<32x32xf32> to vector<8x32xf32>
    %cst_33 = arith.constant dense<0.000000e+00> : vector<16x32xf32>
    %136 = tpu.matmul %134, %135, %cst_33 {dimension_numbers = #tpu.dot_dimension_numbers<[1], [0], [0], [1], [0, 0, 1, 1], [], []>} : vector<16x8xf32>, vector<8x32xf32>, vector<16x32xf32> -> vector<16x32xf32>
    %137 = arith.addf %115, %136 : vector<16x32xf32>
    %cst_34 = arith.constant dense<0.000000e+00> : vector<16xf32>
    %138 = vector.multi_reduction <add>, %137, %cst_34 [1] : vector<16x32xf32> to vector<16xf32>
    %139 = vector.shape_cast %138 : vector<16xf32> to vector<16x1xf32>
    %cst_35 = arith.constant 3.200000e+01 : f32
    %140 = vector.broadcast %cst_35 : f32 to vector<16x1xf32>
    %141 = arith.divf %139, %140 : vector<16x1xf32>
    %142 = vector.broadcast %141 : vector<16x1xf32> to vector<16x32xf32>
    %143 = arith.subf %137, %142 : vector<16x32xf32>
    %144 = arith.mulf %143, %143 : vector<16x32xf32>
    %cst_36 = arith.constant dense<0.000000e+00> : vector<16xf32>
    %145 = vector.multi_reduction <add>, %144, %cst_36 [1] : vector<16x32xf32> to vector<16xf32>
    %146 = vector.shape_cast %145 : vector<16xf32> to vector<16x1xf32>
    %cst_37 = arith.constant 3.200000e+01 : f32
    %147 = vector.broadcast %cst_37 : f32 to vector<16x1xf32>
    %148 = arith.divf %146, %147 : vector<16x1xf32>
    %149 = vector.broadcast %141 : vector<16x1xf32> to vector<16x32xf32>
    %150 = arith.subf %137, %149 : vector<16x32xf32>
    %cst_38 = arith.constant 9.99999974E-6 : f32
    %151 = vector.broadcast %cst_38 : f32 to vector<16x1xf32>
    %152 = arith.addf %148, %151 : vector<16x1xf32>
    %153 = math.rsqrt %152 : vector<16x1xf32>
    %154 = vector.broadcast %153 : vector<16x1xf32> to vector<16x32xf32>
    %155 = arith.mulf %150, %154 : vector<16x32xf32>
    %156 = vector.broadcast %4 : vector<1x32xf32> to vector<16x32xf32>
    %157 = arith.mulf %155, %156 : vector<16x32xf32>
    %158 = vector.broadcast %5 : vector<1x32xf32> to vector<16x32xf32>
    %159 = arith.addf %157, %158 : vector<16x32xf32>
    %c2 = arith.constant 2 : index
    %c0_39 = arith.constant 0 : index
    %c0_40 = arith.constant 0 : index
    %160 = vector.load %arg2[%c2, %c0_39, %c0_40] : memref<4x32x96xf32, #tpu.memory_space<vmem>>, vector<1x32x96xf32>
    %161 = vector.shape_cast %160 : vector<1x32x96xf32> to vector<32x96xf32>
    %162 = vector.extract_strided_slice %161 {offsets = [0, 0], sizes = [32, 64], strides = [1, 1]} : vector<32x96xf32> to vector<32x64xf32>
    %c3 = arith.constant 3 : index
    %c0_41 = arith.constant 0 : index
    %c0_42 = arith.constant 0 : index
    %163 = vector.load %arg2[%c3, %c0_41, %c0_42] : memref<4x32x96xf32, #tpu.memory_space<vmem>>, vector<1x32x96xf32>
    %164 = vector.shape_cast %163 : vector<1x32x96xf32> to vector<32x96xf32>
    %165 = vector.extract_strided_slice %164 {offsets = [0, 0], sizes = [32, 64], strides = [1, 1]} : vector<32x96xf32> to vector<32x64xf32>
    %cst_43 = arith.constant dense<0.000000e+00> : vector<16x64xf32>
    %166 = tpu.matmul %159, %162, %cst_43 {dimension_numbers = #tpu.dot_dimension_numbers<[1], [0], [0], [1], [0, 0, 1, 1], [], []>} : vector<16x32xf32>, vector<32x64xf32>, vector<16x64xf32> -> vector<16x64xf32>
    %167 = vector.broadcast %9 : vector<1x64xf32> to vector<16x64xf32>
    %168 = arith.addf %166, %167 : vector<16x64xf32>
    %cst_44 = arith.constant 0.000000e+00 : f32
    %169 = vector.broadcast %cst_44 : f32 to vector<16x64xf32>
    %170 = arith.maximumf %168, %169 : vector<16x64xf32>
    %cst_45 = arith.constant dense<0.000000e+00> : vector<16x32xf32>
    %171 = tpu.matmul %170, %165, %cst_45 {dimension_numbers = #tpu.dot_dimension_numbers<[1], [1], [0], [0], [0, 0, 1, 0], [], []>} : vector<16x64xf32>, vector<32x64xf32>, vector<16x32xf32> -> vector<16x32xf32>
    %172 = vector.broadcast %10 : vector<1x32xf32> to vector<16x32xf32>
    %173 = arith.addf %171, %172 : vector<16x32xf32>
    %174 = arith.addf %159, %173 : vector<16x32xf32>
    %cst_46 = arith.constant dense<0.000000e+00> : vector<16xf32>
    %175 = vector.multi_reduction <add>, %174, %cst_46 [1] : vector<16x32xf32> to vector<16xf32>
    %176 = vector.shape_cast %175 : vector<16xf32> to vector<16x1xf32>
    %cst_47 = arith.constant 3.200000e+01 : f32
    %177 = vector.broadcast %cst_47 : f32 to vector<16x1xf32>
    %178 = arith.divf %176, %177 : vector<16x1xf32>
    %179 = vector.broadcast %178 : vector<16x1xf32> to vector<16x32xf32>
    %180 = arith.subf %174, %179 : vector<16x32xf32>
    %181 = arith.mulf %180, %180 : vector<16x32xf32>
    %cst_48 = arith.constant dense<0.000000e+00> : vector<16xf32>
    %182 = vector.multi_reduction <add>, %181, %cst_48 [1] : vector<16x32xf32> to vector<16xf32>
    %183 = vector.shape_cast %182 : vector<16xf32> to vector<16x1xf32>
    %cst_49 = arith.constant 3.200000e+01 : f32
    %184 = vector.broadcast %cst_49 : f32 to vector<16x1xf32>
    %185 = arith.divf %183, %184 : vector<16x1xf32>
    %186 = vector.broadcast %178 : vector<16x1xf32> to vector<16x32xf32>
    %187 = arith.subf %174, %186 : vector<16x32xf32>
    %cst_50 = arith.constant 9.99999974E-6 : f32
    %188 = vector.broadcast %cst_50 : f32 to vector<16x1xf32>
    %189 = arith.addf %185, %188 : vector<16x1xf32>
    %190 = math.rsqrt %189 : vector<16x1xf32>
    %191 = vector.broadcast %190 : vector<16x1xf32> to vector<16x32xf32>
    %192 = arith.mulf %187, %191 : vector<16x32xf32>
    %193 = vector.broadcast %6 : vector<1x32xf32> to vector<16x32xf32>
    %194 = arith.mulf %192, %193 : vector<16x32xf32>
    %195 = vector.broadcast %7 : vector<1x32xf32> to vector<16x32xf32>
    %196 = arith.addf %194, %195 : vector<16x32xf32>
    %197 = vector.shape_cast %196 : vector<16x32xf32> to vector<2x8x32xf32>
    %c0_51 = arith.constant 0 : index
    %c0_52 = arith.constant 0 : index
    %c0_53 = arith.constant 0 : index
    %198 = vector.load %arg4[%c0_51, %c0_52, %c0_53] : memref<2x8x32xf32, #tpu.memory_space<vmem>>, vector<2x8x32xf32>
    tpu.vector_store %arg4[%c0_51, %c0_52, %c0_53], %197 {strides = array<i32>} : memref<2x8x32xf32, #tpu.memory_space<vmem>>, vector<2x8x32xf32>,
    return
  }
  func.func @transform_0(%arg0: i32) -> (i32, i32) {
    %c0_i32 = arith.constant 0 : i32
    %c0_i32_0 = arith.constant 0 : i32
    %c0_i32_1 = arith.constant 0 : i32
    return %c0_i32, %c0_i32_0 : i32, i32
  }
  func.func @transform_1(%arg0: i32) -> (i32, i32, i32) {
    %c0_i32 = arith.constant 0 : i32
    %c0_i32_0 = arith.constant 0 : i32
    %c0_i32_1 = arith.constant 0 : i32
    %c0_i32_2 = arith.constant 0 : i32
    return %c0_i32, %c0_i32_0, %c0_i32_1 : i32, i32, i32
  }
  func.func @transform_2(%arg0: i32) -> (i32, i32) {
    %c0_i32 = arith.constant 0 : i32
    %c0_i32_0 = arith.constant 0 : i32
    %c0_i32_1 = arith.constant 0 : i32
    return %c0_i32, %c0_i32_0 : i32, i32
  }
  func.func @transform_3(%arg0: i32) -> (i32, i32, i32) {
    %c0_i32 = arith.constant 0 : i32
    %c0_i32_0 = arith.constant 0 : i32
    %c0_i32_1 = arith.constant 0 : i32
    %c0_i32_2 = arith.constant 0 : i32
    return %c0_i32, %c0_i32_0, %c0_i32_1 : i32, i32, i32
  }
}

</mosaic_0001>

<llo_original>
// kernel: tpu_custom_call.1
$region0: #{tpu_custom_call.1}
  #allocation0 [shape = 'u32[]', space=smem, size = 0x4, offset = 0x4, fixed_abs, tag = 'smem constant byte address 0x4 - core index']
  #allocation1 [shape = 'u32[144,128]{1,0:T(1,128)}', space=vmem, size = 0x12000, scoped, tag = 'internal scratch']
  %s0 = inlined_call_operand.vmem [shape: f32[48,32], index: 0, kind: input, shape index: {}]
  %s1 = inlined_call_operand.hbm [shape: f32[4,32,96], index: 1, kind: input, shape index: {}]
  %s2 = inlined_call_operand.vmem [shape: f32[10,96], index: 2, kind: input, shape index: {}]
  %s3 = inlined_call_operand.hbm [shape: f32[2,8,32], index: 3, kind: output, shape index: {}]
  %s4 = sld [smem:[#allocation0]]
  $region26: #{tpu_custom_call.1} parent=0
    _
  %s6 = ssub.s32 1, %s4
  %s7 = scalar_select 0, %s6, %s4
  $region1: #{tpu_custom_call.1} parent=0
    #allocation2 [shape = 'u8[65536]{0}', space=vmem, size = 0x10000, scoped, tag = 'input window, operand 1, single buffered']
    #allocation3 [shape = 's32[1]{0}', space=sflag, size = 0x4, scoped, tag = 'scoped memory for tpu_custom_call.1']
    #allocation4 [shape = 's32[1]{0}', space=sflag, size = 0x4, scoped, tag = 'scoped memory for tpu_custom_call.1']
    #allocation5 [shape = 'u8[8192]{0}', space=vmem, size = 0x2000, scoped, tag = 'output window, operand 0, single buffered']
    %8 = vsyncpa [#allocation3], 0
    %9 = vsyncpa [#allocation4], 0
    // Predicated region
    $region2: #{tpu_custom_call.1} parent=1 // pred_check
      _
    $region3: #{tpu_custom_call.1} parent=1 // pred_check_branch
      %11 = sbr.rel (0) target = $region5
    $region4: #{tpu_custom_call.1} parent=1 // pred_region
      _
    $region5: #{tpu_custom_call.1} parent=1 // pred_fallthru
      _
    // Predicated region
    $region6: #{tpu_custom_call.1} parent=1 // pred_check
      _
    $region7: #{tpu_custom_call.1} parent=1 // pred_check_branch
      %13 = sbr.rel (0) target = $region9
    $region8: #{tpu_custom_call.1} parent=1 // pred_region
      %s15 = ssub.s32 2048, 2048
      %16 = vsyncadd [#allocation3], %s15
      %s17 = sshll.u32 [#allocation2], 4
      %s18 = int_to_ptr.vmem [resolvable:$true] %s17
      %23 = dma.hbm_to_vmem [thread:$0]  %s1, 2048, %s18, [#allocation3], 128, 128, 8
    $region9: #{tpu_custom_call.1} parent=1 // pred_fallthru
      _
    // Predicated region
    $region10: #{tpu_custom_call.1} parent=1 // pred_check
      _
    $region11: #{tpu_custom_call.1} parent=1 // pred_check_branch
      %25 = sbr.rel (0) target = $region13
    $region12: #{tpu_custom_call.1} parent=1 // pred_region
      _
    $region13: #{tpu_custom_call.1} parent=1 // pred_fallthru
      _
    // Predicated region
    $region14: #{tpu_custom_call.1} parent=1 // pred_check
      _
    $region15: #{tpu_custom_call.1} parent=1 // pred_check_branch
      %27 = sbr.rel (0) target = $region17
    $region16: #{tpu_custom_call.1} parent=1 // pred_region
      %28 = dma.done [#allocation3], 2048
    $region17: #{tpu_custom_call.1} parent=1 // pred_fallthru
      _
    %v29 = vld [vmem:[%s2] sm:$0xff]
    %v30 = vld [vmem:[%s2 + $0x8] sm:$0x3]
    %v31 = vld [vmem:[%s0] sm:$0xff]
    %v32 = vld [vmem:[%s0 + $0x8] sm:$0xff]
    %v33 = vld [vmem:[%s0 + $0x10] sm:$0xff]
    %v34 = vld [vmem:[%s0 + $0x18] sm:$0xff]
    %v35 = vld [vmem:[%s0 + $0x20] sm:$0xff]
    %v36 = vld [vmem:[%s0 + $0x28] sm:$0xff]
    %vm37 = vcmask 261120
    %v38 = vsel %vm37, %v31, 0.0
    %39 = vadd.xlane.f32.xlu0 %v38
    %v40 = vpop.xlane.xlu0 %39
    %v41 = vsel %vm37, %v32, 0.0
    %42 = vadd.xlane.f32.xlu0 %v41
    %v43 = vpop.xlane.xlu0 %42
    %v44 = vsel %vm37, %v33, 0.0
    %45 = vadd.xlane.f32.xlu0 %v44
    %v46 = vpop.xlane.xlu0 %45
    %v47 = vsel %vm37, %v34, 0.0
    %48 = vadd.xlane.f32.xlu0 %v47
    %v49 = vpop.xlane.xlu0 %48
    %v50 = vsel %vm37, %v35, 0.0
    %51 = vadd.xlane.f32.xlu0 %v50
    %v52 = vpop.xlane.xlu0 %51
    %v53 = vsel %vm37, %v36, 0.0
    %54 = vadd.xlane.f32.xlu0 %v53
    %v55 = vpop.xlane.xlu0 %54
    %v56 = vrcp.pop 32.0
    %v57 = vmul.f32 %v40, %v56
    %v58 = vmul.f32 %v43, %v56
    %v59 = vmul.f32 %v46, %v56
    %v60 = vmul.f32 %v49, %v56
    %v61 = vmul.f32 %v52, %v56
    %v62 = vmul.f32 %v55, %v56
    %v63 = vsub.f32 %v31, %v57
    %v64 = vsub.f32 %v32, %v58
    %v65 = vsub.f32 %v33, %v59
    %v66 = vsub.f32 %v34, %v60
    %v67 = vsub.f32 %v35, %v61
    %v68 = vsub.f32 %v36, %v62
    %v69 = vmul.f32 %v63, %v63
    %v70 = vmul.f32 %v64, %v64
    %v71 = vmul.f32 %v65, %v65
    %v72 = vmul.f32 %v66, %v66
    %v73 = vmul.f32 %v67, %v67
    %v74 = vmul.f32 %v68, %v68
    %v75 = vsel %vm37, %v69, 0.0
    %76 = vadd.xlane.f32.xlu0 %v75
    %v77 = vpop.xlane.xlu0 %76
    %v78 = vsel %vm37, %v70, 0.0
    %79 = vadd.xlane.f32.xlu0 %v78
    %v80 = vpop.xlane.xlu0 %79
    %v81 = vsel %vm37, %v71, 0.0
    %82 = vadd.xlane.f32.xlu0 %v81
    %v83 = vpop.xlane.xlu0 %82
    %v84 = vsel %vm37, %v72, 0.0
    %85 = vadd.xlane.f32.xlu0 %v84
    %v86 = vpop.xlane.xlu0 %85
    %v87 = vsel %vm37, %v73, 0.0
    %88 = vadd.xlane.f32.xlu0 %v87
    %v89 = vpop.xlane.xlu0 %88
    %v90 = vsel %vm37, %v74, 0.0
    %91 = vadd.xlane.f32.xlu0 %v90
    %v92 = vpop.xlane.xlu0 %91
    %v93 = vmul.f32 %v77, %v56
    %v94 = vmul.f32 %v80, %v56
    %v95 = vmul.f32 %v83, %v56
    %v96 = vmul.f32 %v86, %v56
    %v97 = vmul.f32 %v89, %v56
    %v98 = vmul.f32 %v92, %v56
    %v99 = vadd.f32 %v93, 1e-05
    %v100 = vadd.f32 %v94, 1e-05
    %v101 = vadd.f32 %v95, 1e-05
    %v102 = vadd.f32 %v96, 1e-05
    %v103 = vadd.f32 %v97, 1e-05
    %v104 = vadd.f32 %v98, 1e-05
    %v105 = vrsqrt.pop %v99
    %v106 = vrsqrt.pop %v100
    %v107 = vrsqrt.pop %v101
    %v108 = vrsqrt.pop %v102
    %v109 = vrsqrt.pop %v103
    %v110 = vrsqrt.pop %v104
    %v111 = vmul.f32 %v63, %v105
    %v112 = vmul.f32 %v64, %v106
    %v113 = vmul.f32 %v65, %v107
    %v114 = vmul.f32 %v66, %v108
    %v115 = vmul.f32 %v67, %v109
    %v116 = vmul.f32 %v68, %v110
    %v117 = vlaneseq
    %v118 = vshrl.u32 %v117, 7
    %v119 = vsub.s32 1, %v118
    %v120 = vrot.slane %v29, %v119
    %v121 = vmul.f32 %v111, %v120
    %v122 = vmul.f32 %v112, %v120
    %v123 = vmul.f32 %v113, %v120
    %v124 = vmul.f32 %v114, %v120
    %v125 = vmul.f32 %v115, %v120
    %v126 = vmul.f32 %v116, %v120
    %v127 = vlaneseq
    %v128 = vshrl.u32 %v127, 7
    %v129 = vsub.s32 2, %v128
    %v130 = vrot.slane %v29, %v129
    %v131 = vadd.f32 %v121, %v130
    %v132 = vadd.f32 %v122, %v130
    %v133 = vadd.f32 %v123, %v130
    %v134 = vadd.f32 %v124, %v130
    %v135 = vadd.f32 %v125, %v130
    %v136 = vadd.f32 %v126, %v130
    %v137 = vld [vmem:[#allocation2] sm:$0xff]
    %v138 = vld [vmem:[#allocation2 + $0x8] sm:$0xff]
    %v139 = vld [vmem:[#allocation2 + $0x10] sm:$0xff]
    %v140 = vld [vmem:[#allocation2 + $0x18] sm:$0xff]
    %v141 = vlaneseq
    %v142 = vshrl.u32 %v141, 7
    %v143 = vsub.s32 0, %v142
    %v144 = vrot.slane %v29, %v143
    %v146 = vsel %vm37, %v131, 0
    %v149 = vsel %vm37, %v132, 0
    %v152 = vsel %vm37, %v133, 0
    %v155 = vsel %vm37, %v134, 0
    %v158 = vsel %vm37, %v135, 0
    %v161 = vsel %vm37, %v136, 0
    %163 = vmatprep.subr.mxu0 0.0
    %164 = vmatpush1.msra.mxu0 0.0
    %165 = vmatprep.subr.mxu0 0.0
    %166 = vmatpush1.msra.mxu0 0.0
    %167 = vmatprep.subr.mxu0 0.0
    %168 = vmatpush1.msra.mxu0 0.0
    %169 = vmatprep.subr.mxu0 0.0
    %170 = vmatpush1.msra.mxu0 0.0
    %171 = vmatprep.subr.mxu0 0.0
    %172 = vmatpush1.msra.mxu0 0.0
    %173 = vmatprep.subr.mxu0 0.0
    %174 = vmatpush1.msra.mxu0 0.0
    %175 = vmatprep.subr.mxu0 0.0
    %176 = vmatpush1.msra.mxu0 0.0
    %177 = vmatprep.subr.mxu0 0.0
    %178 = vmatpush1.msra.mxu0 0.0
    %179 = vmatprep.subr.mxu0 0.0
    %180 = vmatpush1.msra.mxu0 0.0
    %181 = vmatprep.subr.mxu0 0.0
    %182 = vmatpush1.msra.mxu0 0.0
    %183 = vmatprep.subr.mxu0 0.0
    %184 = vmatpush1.msra.mxu0 0.0
    %185 = vmatprep.subr.mxu0 0.0
    %186 = vmatpush1.msra.mxu0 0.0
    %187 = vmatprep.subr.mxu0 0.0
    %188 = vmatpush1.msra.mxu0 %v140
    %189 = vmatprep.subr.mxu0 0.0
    %190 = vmatpush1.msra.mxu0 %v139
    %191 = vmatprep.subr.mxu0 0.0
    %192 = vmatpush1.msra.mxu0 %v138
    %193 = vmatprep.subr.mxu0 0.0
    %194 = vmatpush1.msra.mxu0 %v137
    %195 = vmatprep.subr.mxu0 0.0
    %196 = vmatpush2.msra.mxu0 0.0
    %197 = vmatprep.subr.mxu0 0.0
    %198 = vmatpush2.msra.mxu0 0.0
    %199 = vmatprep.subr.mxu0 0.0
    %200 = vmatpush2.msra.mxu0 0.0
    %201 = vmatprep.subr.mxu0 0.0
    %202 = vmatpush2.msra.mxu0 0.0
    %203 = vmatprep.subr.mxu0 0.0
    %204 = vmatpush2.msra.mxu0 0.0
    %205 = vmatprep.subr.mxu0 0.0
    %206 = vmatpush2.msra.mxu0 0.0
    %207 = vmatprep.subr.mxu0 0.0
    %208 = vmatpush2.msra.mxu0 0.0
    %209 = vmatprep.subr.mxu0 0.0
    %210 = vmatpush2.msra.mxu0 0.0
    %211 = vmatprep.subr.mxu0 0.0
    %212 = vmatpush2.msra.mxu0 0.0
    %213 = vmatprep.subr.mxu0 0.0
    %214 = vmatpush2.msra.mxu0 0.0
    %215 = vmatprep.subr.mxu0 0.0
    %216 = vmatpush2.msra.mxu0 0.0
    %217 = vmatprep.subr.mxu0 0.0
    %218 = vmatpush2.msra.mxu0 0.0
    %219 = vmatprep.subr.mxu0 0.0
    %220 = vmatpush2.msra.mxu0 0.0
    %221 = vmatprep.subr.mxu0 0.0
    %222 = vmatpush2.msra.mxu0 0.0
    %223 = vmatprep.subr.mxu0 0.0
    %224 = vmatpush2.msra.mxu0 0.0
    %225 = vmatprep.subr.mxu0 0.0
    %226 = vmatpush2.msra.mxu0 0.0
    %227 = vmatprep.mubr.f32.mxu0 0.0
    %228 = vmatmul.mubr.f32.gmra.mxu0 %v146
    %v229 = vpop.f32.mrf.mxu0
    %v230 = vadd.f32 %v144, %v229
    %v231 = vpop.f32.mrf.mxu0
    %232 = vmatprep.mubr.f32.mxu0 0.0
    %233 = vmatmul.mubr.f32.gmra.mxu0 %v149
    %v234 = vpop.f32.mrf.mxu0
    %v235 = vadd.f32 %v144, %v234
    %v236 = vpop.f32.mrf.mxu0
    %237 = vmatprep.mubr.f32.mxu0 0.0
    %238 = vmatmul.mubr.f32.gmra.mxu0 %v152
    %v239 = vpop.f32.mrf.mxu0
    %v240 = vadd.f32 %v144, %v239
    %v241 = vpop.f32.mrf.mxu0
    %242 = vmatprep.mubr.f32.mxu0 0.0
    %243 = vmatmul.mubr.f32.gmra.mxu0 %v155
    %v244 = vpop.f32.mrf.mxu0
    %v245 = vadd.f32 %v144, %v244
    %v246 = vpop.f32.mrf.mxu0
    %247 = vmatprep.mubr.f32.mxu0 0.0
    %248 = vmatmul.mubr.f32.gmra.mxu0 %v158
    %v249 = vpop.f32.mrf.mxu0
    %v250 = vadd.f32 %v144, %v249
    %v251 = vpop.f32.mrf.mxu0
    %252 = vmatprep.mubr.f32.mxu0 0.0
    %253 = vmatmul.mubr.f32.gmra.mxu0 %v161
    %v254 = vpop.f32.mrf.mxu0
    %v255 = vadd.f32 %v144, %v254
    %v256 = vpop.f32.mrf.mxu0
    %257 = vdwg.mxu0
    %v258 = vmul.f32 %v230, 0.35355338
    %v259 = vmul.f32 %v235, 0.35355338
    %s260 = scalar_lea.vmem [#allocation2], 32
    %v261 = vld [vmem:[%s260] sm:$0xff]
    %v262 = vld [vmem:[%s260 + $0x8] sm:$0xff]
    %v263 = vld [vmem:[%s260 + $0x10] sm:$0xff]
    %v264 = vld [vmem:[%s260 + $0x18] sm:$0xff]
    %v265 = vlaneseq
    %v266 = vshrl.u32 %v265, 7
    %v267 = vsub.s32 7, %v266
    %v268 = vrot.slane %v29, %v267
    %v269 = vadd.f32 %v131, %v268
    %v270 = vadd.f32 %v132, %v268
    %272 = vrot.lane.b32.xlu0 %v240, 96
    %v273 = vpop.permute.xlu0 %272
    %vm274 = vcmask 64512
    %v276 = vsel %vm274, %v258, 0
    %v278 = vsel %vm274, %v273, 0
    %280 = vmatprep.subr.mxu0 0.0
    %281 = vmatpush1.xpose.msra.mxu0 0.0
    %282 = vmatprep.subr.mxu0 0.0
    %283 = vmatpush1.xpose.msra.mxu0 0.0
    %284 = vmatprep.subr.mxu0 0.0
    %285 = vmatpush1.xpose.msra.mxu0 0.0
    %286 = vmatprep.subr.mxu0 0.0
    %287 = vmatpush1.xpose.msra.mxu0 0.0
    %288 = vmatprep.subr.mxu0 0.0
    %289 = vmatpush1.xpose.msra.mxu0 0.0
    %290 = vmatprep.subr.mxu0 0.0
    %291 = vmatpush1.xpose.msra.mxu0 0.0
    %292 = vmatprep.subr.mxu0 0.0
    %293 = vmatpush1.xpose.msra.mxu0 0.0
    %294 = vmatprep.subr.mxu0 0.0
    %295 = vmatpush1.xpose.msra.mxu0 0.0
    %296 = vmatprep.subr.mxu0 0.0
    %297 = vmatpush1.xpose.msra.mxu0 0.0
    %298 = vmatprep.subr.mxu0 0.0
    %299 = vmatpush1.xpose.msra.mxu0 0.0
    %300 = vmatprep.subr.mxu0 0.0
    %301 = vmatpush1.xpose.msra.mxu0 0.0
    %302 = vmatprep.subr.mxu0 0.0
    %303 = vmatpush1.xpose.msra.mxu0 0.0
    %304 = vmatprep.subr.mxu0 0.0
    %305 = vmatpush1.xpose.msra.mxu0 0.0
    %306 = vmatprep.subr.mxu0 0.0
    %307 = vmatpush1.xpose.msra.mxu0 0.0
    %308 = vmatprep.subr.mxu0 0.0
    %309 = vmatpush1.xpose.msra.mxu0 0.0
    %310 = vmatprep.subr.mxu0 0.0
    %311 = vmatpush1.xpose.msra.mxu0 %v278
    %312 = vmatprep.subr.mxu0 0.0
    %313 = vmatpush2.xpose.msra.mxu0 0.0
    %314 = vmatprep.subr.mxu0 0.0
    %315 = vmatpush2.xpose.msra.mxu0 0.0
    %316 = vmatprep.subr.mxu0 0.0
    %317 = vmatpush2.xpose.msra.mxu0 0.0
    %318 = vmatprep.subr.mxu0 0.0
    %319 = vmatpush2.xpose.msra.mxu0 0.0
    %320 = vmatprep.subr.mxu0 0.0
    %321 = vmatpush2.xpose.msra.mxu0 0.0
    %322 = vmatprep.subr.mxu0 0.0
    %323 = vmatpush2.xpose.msra.mxu0 0.0
    %324 = vmatprep.subr.mxu0 0.0
    %325 = vmatpush2.xpose.msra.mxu0 0.0
    %326 = vmatprep.subr.mxu0 0.0
    %327 = vmatpush2.xpose.msra.mxu0 0.0
    %328 = vmatprep.subr.mxu0 0.0
    %329 = vmatpush2.xpose.msra.mxu0 0.0
    %330 = vmatprep.subr.mxu0 0.0
    %331 = vmatpush2.xpose.msra.mxu0 0.0
    %332 = vmatprep.subr.mxu0 0.0
    %333 = vmatpush2.xpose.msra.mxu0 0.0
    %334 = vmatprep.subr.mxu0 0.0
    %335 = vmatpush2.xpose.msra.mxu0 0.0
    %336 = vmatprep.subr.mxu0 0.0
    %337 = vmatpush2.xpose.msra.mxu0 0.0
    %338 = vmatprep.subr.mxu0 0.0
    %339 = vmatpush2.xpose.msra.mxu0 0.0
    %340 = vmatprep.subr.mxu0 0.0
    %341 = vmatpush2.xpose.msra.mxu0 0.0
    %342 = vmatprep.subr.mxu0 0.0
    %343 = vmatpush2.xpose.msra.mxu0 0.0
    %344 = vmatprep.mubr.f32.mxu0 0.0
    %345 = vmatmul.mubr.f32.gmra.mxu0 %v276
    %v346 = vpop.f32.mrf.mxu0
    %v347 = vadd.f32 0.0, %v346
    %v348 = vpop.f32.mrf.mxu0
    %349 = vdwg.mxu0
    %351 = vrot.lane.b32.xlu0 %v245, 96
    %v352 = vpop.permute.xlu0 %351
    %v354 = vsel %vm274, %v259, 0
    %v356 = vsel %vm274, %v352, 0
    %358 = vmatprep.subr.mxu0 0.0
    %359 = vmatpush1.xpose.msra.mxu0 0.0
    %360 = vmatprep.subr.mxu0 0.0
    %361 = vmatpush1.xpose.msra.mxu0 0.0
    %362 = vmatprep.subr.mxu0 0.0
    %363 = vmatpush1.xpose.msra.mxu0 0.0
    %364 = vmatprep.subr.mxu0 0.0
    %365 = vmatpush1.xpose.msra.mxu0 0.0
    %366 = vmatprep.subr.mxu0 0.0
    %367 = vmatpush1.xpose.msra.mxu0 0.0
    %368 = vmatprep.subr.mxu0 0.0
    %369 = vmatpush1.xpose.msra.mxu0 0.0
    %370 = vmatprep.subr.mxu0 0.0
    %371 = vmatpush1.xpose.msra.mxu0 0.0
    %372 = vmatprep.subr.mxu0 0.0
    %373 = vmatpush1.xpose.msra.mxu0 0.0
    %374 = vmatprep.subr.mxu0 0.0
    %375 = vmatpush1.xpose.msra.mxu0 0.0
    %376 = vmatprep.subr.mxu0 0.0
    %377 = vmatpush1.xpose.msra.mxu0 0.0
    %378 = vmatprep.subr.mxu0 0.0
    %379 = vmatpush1.xpose.msra.mxu0 0.0
    %380 = vmatprep.subr.mxu0 0.0
    %381 = vmatpush1.xpose.msra.mxu0 0.0
    %382 = vmatprep.subr.mxu0 0.0
    %383 = vmatpush1.xpose.msra.mxu0 0.0
    %384 = vmatprep.subr.mxu0 0.0
    %385 = vmatpush1.xpose.msra.mxu0 0.0
    %386 = vmatprep.subr.mxu0 0.0
    %387 = vmatpush1.xpose.msra.mxu0 0.0
    %388 = vmatprep.subr.mxu0 0.0
    %389 = vmatpush1.xpose.msra.mxu0 %v356
    %390 = vmatprep.subr.mxu0 0.0
    %391 = vmatpush2.xpose.msra.mxu0 0.0
    %392 = vmatprep.subr.mxu0 0.0
    %393 = vmatpush2.xpose.msra.mxu0 0.0
    %394 = vmatprep.subr.mxu0 0.0
    %395 = vmatpush2.xpose.msra.mxu0 0.0
    %396 = vmatprep.subr.mxu0 0.0
    %397 = vmatpush2.xpose.msra.mxu0 0.0
    %398 = vmatprep.subr.mxu0 0.0
    %399 = vmatpush2.xpose.msra.mxu0 0.0
    %400 = vmatprep.subr.mxu0 0.0
    %401 = vmatpush2.xpose.msra.mxu0 0.0
    %402 = vmatprep.subr.mxu0 0.0
    %403 = vmatpush2.xpose.msra.mxu0 0.0
    %404 = vmatprep.subr.mxu0 0.0
    %405 = vmatpush2.xpose.msra.mxu0 0.0
    %406 = vmatprep.subr.mxu0 0.0
    %407 = vmatpush2.xpose.msra.mxu0 0.0
    %408 = vmatprep.subr.mxu0 0.0
    %409 = vmatpush2.xpose.msra.mxu0 0.0
    %410 = vmatprep.subr.mxu0 0.0
    %411 = vmatpush2.xpose.msra.mxu0 0.0
    %412 = vmatprep.subr.mxu0 0.0
    %413 = vmatpush2.xpose.msra.mxu0 0.0
    %414 = vmatprep.subr.mxu0 0.0
    %415 = vmatpush2.xpose.msra.mxu0 0.0
    %416 = vmatprep.subr.mxu0 0.0
    %417 = vmatpush2.xpose.msra.mxu0 0.0
    %418 = vmatprep.subr.mxu0 0.0
    %419 = vmatpush2.xpose.msra.mxu0 0.0
    %420 = vmatprep.subr.mxu0 0.0
    %421 = vmatpush2.xpose.msra.mxu0 0.0
    %422 = vmatprep.mubr.f32.mxu0 0.0
    %423 = vmatmul.mubr.f32.gmra.mxu0 %v354
    %v424 = vpop.f32.mrf.mxu0
    %v425 = vadd.f32 0.0, %v424
    %v426 = vpop.f32.mrf.mxu0
    %427 = vdwg.mxu0
    %v428 = vsel %vm274, %v347, -inf
    %429 = vmax.xlane.f32.xlu0 %v428
    %v430 = vpop.xlane.xlu0 %429
    %v431 = vsel %vm274, %v425, -inf
    %432 = vmax.xlane.f32.xlu0 %v431
    %v433 = vpop.xlane.xlu0 %432
    %v434 = vsub.f32 %v347, %v430
    %v435 = vsub.f32 %v425, %v433
    %v436 = vmul.f32 %v434, 1.442695
    %v437 = vpow.pop %v436
    %v438 = vmul.f32 %v435, 1.442695
    %v439 = vpow.pop %v438
    %v440 = vsel %vm274, %v437, 0.0
    %441 = vadd.xlane.f32.xlu0 %v440
    %v442 = vpop.xlane.xlu0 %441
    %v443 = vsel %vm274, %v439, 0.0
    %444 = vadd.xlane.f32.xlu0 %v443
    %v445 = vpop.xlane.xlu0 %444
    %v446 = vrcp.pop %v442
    %v447 = vrcp.pop %v445
    %v448 = vmul.f32 %v437, %v446
    %v449 = vmul.f32 %v439, %v447
    %451 = vrot.lane.b32.xlu0 %v250, 64
    %v452 = vpop.permute.xlu0 %451
    %v455 = vsel %vm274, %v448, 0
    %457 = vmatprep.subr.mxu0 0.0
    %458 = vmatpush1.msra.mxu0 0.0
    %459 = vmatprep.subr.mxu0 0.0
    %460 = vmatpush1.msra.mxu0 0.0
    %461 = vmatprep.subr.mxu0 0.0
    %462 = vmatpush1.msra.mxu0 0.0
    %463 = vmatprep.subr.mxu0 0.0
    %464 = vmatpush1.msra.mxu0 0.0
    %465 = vmatprep.subr.mxu0 0.0
    %466 = vmatpush1.msra.mxu0 0.0
    %467 = vmatprep.subr.mxu0 0.0
    %468 = vmatpush1.msra.mxu0 0.0
    %469 = vmatprep.subr.mxu0 0.0
    %470 = vmatpush1.msra.mxu0 0.0
    %471 = vmatprep.subr.mxu0 0.0
    %472 = vmatpush1.msra.mxu0 0.0
    %473 = vmatprep.subr.mxu0 0.0
    %474 = vmatpush1.msra.mxu0 0.0
    %475 = vmatprep.subr.mxu0 0.0
    %476 = vmatpush1.msra.mxu0 0.0
    %477 = vmatprep.subr.mxu0 0.0
    %478 = vmatpush1.msra.mxu0 0.0
    %479 = vmatprep.subr.mxu0 0.0
    %480 = vmatpush1.msra.mxu0 0.0
    %481 = vmatprep.subr.mxu0 0.0
    %482 = vmatpush1.msra.mxu0 0.0
    %483 = vmatprep.subr.mxu0 0.0
    %484 = vmatpush1.msra.mxu0 0.0
    %485 = vmatprep.subr.mxu0 0.0
    %486 = vmatpush1.msra.mxu0 0.0
    %487 = vmatprep.subr.mxu0 0.0
    %488 = vmatpush1.msra.mxu0 %v452
    %489 = vmatprep.subr.mxu0 0.0
    %490 = vmatpush2.msra.mxu0 0.0
    %491 = vmatprep.subr.mxu0 0.0
    %492 = vmatpush2.msra.mxu0 0.0
    %493 = vmatprep.subr.mxu0 0.0
    %494 = vmatpush2.msra.mxu0 0.0
    %495 = vmatprep.subr.mxu0 0.0
    %496 = vmatpush2.msra.mxu0 0.0
    %497 = vmatprep.subr.mxu0 0.0
    %498 = vmatpush2.msra.mxu0 0.0
    %499 = vmatprep.subr.mxu0 0.0
    %500 = vmatpush2.msra.mxu0 0.0
    %501 = vmatprep.subr.mxu0 0.0
    %502 = vmatpush2.msra.mxu0 0.0
    %503 = vmatprep.subr.mxu0 0.0
    %504 = vmatpush2.msra.mxu0 0.0
    %505 = vmatprep.subr.mxu0 0.0
    %506 = vmatpush2.msra.mxu0 0.0
    %507 = vmatprep.subr.mxu0 0.0
    %508 = vmatpush2.msra.mxu0 0.0
    %509 = vmatprep.subr.mxu0 0.0
    %510 = vmatpush2.msra.mxu0 0.0
    %511 = vmatprep.subr.mxu0 0.0
    %512 = vmatpush2.msra.mxu0 0.0
    %513 = vmatprep.subr.mxu0 0.0
    %514 = vmatpush2.msra.mxu0 0.0
    %515 = vmatprep.subr.mxu0 0.0
    %516 = vmatpush2.msra.mxu0 0.0
    %517 = vmatprep.subr.mxu0 0.0
    %518 = vmatpush2.msra.mxu0 0.0
    %519 = vmatprep.subr.mxu0 0.0
    %520 = vmatpush2.msra.mxu0 0.0
    %521 = vmatprep.mubr.f32.mxu0 0.0
    %522 = vmatmul.mubr.f32.gmra.mxu0 %v455
    %v523 = vpop.f32.mrf.mxu0
    %v524 = vadd.f32 0.0, %v523
    %v525 = vpop.f32.mrf.mxu0
    %526 = vdwg.mxu0
    %528 = vrot.lane.b32.xlu0 %v255, 64
    %v529 = vpop.permute.xlu0 %528
    %v532 = vsel %vm274, %v449, 0
    %534 = vmatprep.subr.mxu0 0.0
    %535 = vmatpush1.msra.mxu0 0.0
    %536 = vmatprep.subr.mxu0 0.0
    %537 = vmatpush1.msra.mxu0 0.0
    %538 = vmatprep.subr.mxu0 0.0
    %539 = vmatpush1.msra.mxu0 0.0
    %540 = vmatprep.subr.mxu0 0.0
    %541 = vmatpush1.msra.mxu0 0.0
    %542 = vmatprep.subr.mxu0 0.0
    %543 = vmatpush1.msra.mxu0 0.0
    %544 = vmatprep.subr.mxu0 0.0
    %545 = vmatpush1.msra.mxu0 0.0
    %546 = vmatprep.subr.mxu0 0.0
    %547 = vmatpush1.msra.mxu0 0.0
    %548 = vmatprep.subr.mxu0 0.0
    %549 = vmatpush1.msra.mxu0 0.0
    %550 = vmatprep.subr.mxu0 0.0
    %551 = vmatpush1.msra.mxu0 0.0
    %552 = vmatprep.subr.mxu0 0.0
    %553 = vmatpush1.msra.mxu0 0.0
    %554 = vmatprep.subr.mxu0 0.0
    %555 = vmatpush1.msra.mxu0 0.0
    %556 = vmatprep.subr.mxu0 0.0
    %557 = vmatpush1.msra.mxu0 0.0
    %558 = vmatprep.subr.mxu0 0.0
    %559 = vmatpush1.msra.mxu0 0.0
    %560 = vmatprep.subr.mxu0 0.0
    %561 = vmatpush1.msra.mxu0 0.0
    %562 = vmatprep.subr.mxu0 0.0
    %563 = vmatpush1.msra.mxu0 0.0
    %564 = vmatprep.subr.mxu0 0.0
    %565 = vmatpush1.msra.mxu0 %v529
    %566 = vmatprep.subr.mxu0 0.0
    %567 = vmatpush2.msra.mxu0 0.0
    %568 = vmatprep.subr.mxu0 0.0
    %569 = vmatpush2.msra.mxu0 0.0
    %570 = vmatprep.subr.mxu0 0.0
    %571 = vmatpush2.msra.mxu0 0.0
    %572 = vmatprep.subr.mxu0 0.0
    %573 = vmatpush2.msra.mxu0 0.0
    %574 = vmatprep.subr.mxu0 0.0
    %575 = vmatpush2.msra.mxu0 0.0
    %576 = vmatprep.subr.mxu0 0.0
    %577 = vmatpush2.msra.mxu0 0.0
    %578 = vmatprep.subr.mxu0 0.0
    %579 = vmatpush2.msra.mxu0 0.0
    %580 = vmatprep.subr.mxu0 0.0
    %581 = vmatpush2.msra.mxu0 0.0
    %582 = vmatprep.subr.mxu0 0.0
    %583 = vmatpush2.msra.mxu0 0.0
    %584 = vmatprep.subr.mxu0 0.0
    %585 = vmatpush2.msra.mxu0 0.0
    %586 = vmatprep.subr.mxu0 0.0
    %587 = vmatpush2.msra.mxu0 0.0
    %588 = vmatprep.subr.mxu0 0.0
    %589 = vmatpush2.msra.mxu0 0.0
    %590 = vmatprep.subr.mxu0 0.0
    %591 = vmatpush2.msra.mxu0 0.0
    %592 = vmatprep.subr.mxu0 0.0
    %593 = vmatpush2.msra.mxu0 0.0
    %594 = vmatprep.subr.mxu0 0.0
    %595 = vmatpush2.msra.mxu0 0.0
    %596 = vmatprep.subr.mxu0 0.0
    %597 = vmatpush2.msra.mxu0 0.0
    %598 = vmatprep.mubr.f32.mxu0 0.0
    %599 = vmatmul.mubr.f32.gmra.mxu0 %v532
    %v600 = vpop.f32.mrf.mxu0
    %v601 = vadd.f32 0.0, %v600
    %v602 = vpop.f32.mrf.mxu0
    %603 = vdwg.mxu0
    %v605 = vsel %vm274, %v524, 0
    %v608 = vsel %vm274, %v601, 0
    %610 = vmatprep.subr.mxu0 0.0
    %611 = vmatpush1.msra.mxu0 0.0
    %612 = vmatprep.subr.mxu0 0.0
    %613 = vmatpush1.msra.mxu0 0.0
    %614 = vmatprep.subr.mxu0 0.0
    %615 = vmatpush1.msra.mxu0 0.0
    %616 = vmatprep.subr.mxu0 0.0
    %617 = vmatpush1.msra.mxu0 0.0
    %618 = vmatprep.subr.mxu0 0.0
    %619 = vmatpush1.msra.mxu0 0.0
    %620 = vmatprep.subr.mxu0 0.0
    %621 = vmatpush1.msra.mxu0 0.0
    %622 = vmatprep.subr.mxu0 0.0
    %623 = vmatpush1.msra.mxu0 0.0
    %624 = vmatprep.subr.mxu0 0.0
    %625 = vmatpush1.msra.mxu0 0.0
    %626 = vmatprep.subr.mxu0 0.0
    %627 = vmatpush1.msra.mxu0 0.0
    %628 = vmatprep.subr.mxu0 0.0
    %629 = vmatpush1.msra.mxu0 0.0
    %630 = vmatprep.subr.mxu0 0.0
    %631 = vmatpush1.msra.mxu0 0.0
    %632 = vmatprep.subr.mxu0 0.0
    %633 = vmatpush1.msra.mxu0 0.0
    %634 = vmatprep.subr.mxu0 0.0
    %635 = vmatpush1.msra.mxu0 0.0
    %636 = vmatprep.subr.mxu0 0.0
    %637 = vmatpush1.msra.mxu0 0.0
    %638 = vmatprep.subr.mxu0 0.0
    %639 = vmatpush1.msra.mxu0 0.0
    %640 = vmatprep.subr.mxu0 0.0
    %641 = vmatpush1.msra.mxu0 %v261
    %642 = vmatprep.subr.mxu0 0.0
    %643 = vmatpush2.msra.mxu0 0.0
    %644 = vmatprep.subr.mxu0 0.0
    %645 = vmatpush2.msra.mxu0 0.0
    %646 = vmatprep.subr.mxu0 0.0
    %647 = vmatpush2.msra.mxu0 0.0
    %648 = vmatprep.subr.mxu0 0.0
    %649 = vmatpush2.msra.mxu0 0.0
    %650 = vmatprep.subr.mxu0 0.0
    %651 = vmatpush2.msra.mxu0 0.0
    %652 = vmatprep.subr.mxu0 0.0
    %653 = vmatpush2.msra.mxu0 0.0
    %654 = vmatprep.subr.mxu0 0.0
    %655 = vmatpush2.msra.mxu0 0.0
    %656 = vmatprep.subr.mxu0 0.0
    %657 = vmatpush2.msra.mxu0 0.0
    %658 = vmatprep.subr.mxu0 0.0
    %659 = vmatpush2.msra.mxu0 0.0
    %660 = vmatprep.subr.mxu0 0.0
    %661 = vmatpush2.msra.mxu0 0.0
    %662 = vmatprep.subr.mxu0 0.0
    %663 = vmatpush2.msra.mxu0 0.0
    %664 = vmatprep.subr.mxu0 0.0
    %665 = vmatpush2.msra.mxu0 0.0
    %666 = vmatprep.subr.mxu0 0.0
    %667 = vmatpush2.msra.mxu0 0.0
    %668 = vmatprep.subr.mxu0 0.0
    %669 = vmatpush2.msra.mxu0 0.0
    %670 = vmatprep.subr.mxu0 0.0
    %671 = vmatpush2.msra.mxu0 0.0
    %672 = vmatprep.subr.mxu0 0.0
    %673 = vmatpush2.msra.mxu0 0.0
    %674 = vmatprep.mubr.f32.mxu0 0.0
    %675 = vmatmul.mubr.f32.gmra.mxu0 %v605
    %v676 = vpop.f32.mrf.mxu0
    %v677 = vadd.f32 0.0, %v676
    %v678 = vpop.f32.mrf.mxu0
    %679 = vmatprep.mubr.f32.mxu0 0.0
    %680 = vmatmul.mubr.f32.gmra.mxu0 %v608
    %v681 = vpop.f32.mrf.mxu0
    %v682 = vadd.f32 0.0, %v681
    %v683 = vpop.f32.mrf.mxu0
    %684 = vdwg.mxu0
    %v685 = vadd.f32 %v269, %v677
    %v686 = vadd.f32 %v270, %v682
    %687 = vrot.lane.b32.xlu0 %v258, 120
    %v688 = vpop.permute.xlu0 %687
    %689 = vrot.lane.b32.xlu0 %v240, 88
    %v690 = vpop.permute.xlu0 %689
    %v691 = vsel %vm274, %v688, 0
    %v693 = vsel %vm274, %v690, 0
    %695 = vmatprep.subr.mxu0 0.0
    %696 = vmatpush1.xpose.msra.mxu0 0.0
    %697 = vmatprep.subr.mxu0 0.0
    %698 = vmatpush1.xpose.msra.mxu0 0.0
    %699 = vmatprep.subr.mxu0 0.0
    %700 = vmatpush1.xpose.msra.mxu0 0.0
    %701 = vmatprep.subr.mxu0 0.0
    %702 = vmatpush1.xpose.msra.mxu0 0.0
    %703 = vmatprep.subr.mxu0 0.0
    %704 = vmatpush1.xpose.msra.mxu0 0.0
    %705 = vmatprep.subr.mxu0 0.0
    %706 = vmatpush1.xpose.msra.mxu0 0.0
    %707 = vmatprep.subr.mxu0 0.0
    %708 = vmatpush1.xpose.msra.mxu0 0.0
    %709 = vmatprep.subr.mxu0 0.0
    %710 = vmatpush1.xpose.msra.mxu0 0.0
    %711 = vmatprep.subr.mxu0 0.0
    %712 = vmatpush1.xpose.msra.mxu0 0.0
    %713 = vmatprep.subr.mxu0 0.0
    %714 = vmatpush1.xpose.msra.mxu0 0.0
    %715 = vmatprep.subr.mxu0 0.0
    %716 = vmatpush1.xpose.msra.mxu0 0.0
    %717 = vmatprep.subr.mxu0 0.0
    %718 = vmatpush1.xpose.msra.mxu0 0.0
    %719 = vmatprep.subr.mxu0 0.0
    %720 = vmatpush1.xpose.msra.mxu0 0.0
    %721 = vmatprep.subr.mxu0 0.0
    %722 = vmatpush1.xpose.msra.mxu0 0.0
    %723 = vmatprep.subr.mxu0 0.0
    %724 = vmatpush1.xpose.msra.mxu0 0.0
    %725 = vmatprep.subr.mxu0 0.0
    %726 = vmatpush1.xpose.msra.mxu0 %v693
    %727 = vmatprep.subr.mxu0 0.0
    %728 = vmatpush2.xpose.msra.mxu0 0.0
    %729 = vmatprep.subr.mxu0 0.0
    %730 = vmatpush2.xpose.msra.mxu0 0.0
    %731 = vmatprep.subr.mxu0 0.0
    %732 = vmatpush2.xpose.msra.mxu0 0.0
    %733 = vmatprep.subr.mxu0 0.0
    %734 = vmatpush2.xpose.msra.mxu0 0.0
    %735 = vmatprep.subr.mxu0 0.0
    %736 = vmatpush2.xpose.msra.mxu0 0.0
    %737 = vmatprep.subr.mxu0 0.0
    %738 = vmatpush2.xpose.msra.mxu0 0.0
    %739 = vmatprep.subr.mxu0 0.0
    %740 = vmatpush2.xpose.msra.mxu0 0.0
    %741 = vmatprep.subr.mxu0 0.0
    %742 = vmatpush2.xpose.msra.mxu0 0.0
    %743 = vmatprep.subr.mxu0 0.0
    %744 = vmatpush2.xpose.msra.mxu0 0.0
    %745 = vmatprep.subr.mxu0 0.0
    %746 = vmatpush2.xpose.msra.mxu0 0.0
    %747 = vmatprep.subr.mxu0 0.0
    %748 = vmatpush2.xpose.msra.mxu0 0.0
    %749 = vmatprep.subr.mxu0 0.0
    %750 = vmatpush2.xpose.msra.mxu0 0.0
    %751 = vmatprep.subr.mxu0 0.0
    %752 = vmatpush2.xpose.msra.mxu0 0.0
    %753 = vmatprep.subr.mxu0 0.0
    %754 = vmatpush2.xpose.msra.mxu0 0.0
    %755 = vmatprep.subr.mxu0 0.0
    %756 = vmatpush2.xpose.msra.mxu0 0.0
    %757 = vmatprep.subr.mxu0 0.0
    %758 = vmatpush2.xpose.msra.mxu0 0.0
    %759 = vmatprep.mubr.f32.mxu0 0.0
    %760 = vmatmul.mubr.f32.gmra.mxu0 %v691
    %v761 = vpop.f32.mrf.mxu0
    %v762 = vadd.f32 0.0, %v761
    %v763 = vpop.f32.mrf.mxu0
    %764 = vdwg.mxu0
    %765 = vrot.lane.b32.xlu0 %v259, 120
    %v766 = vpop.permute.xlu0 %765
    %767 = vrot.lane.b32.xlu0 %v245, 88
    %v768 = vpop.permute.xlu0 %767
    %v769 = vsel %vm274, %v766, 0
    %v771 = vsel %vm274, %v768, 0
    %773 = vmatprep.subr.mxu0 0.0
    %774 = vmatpush1.xpose.msra.mxu0 0.0
    %775 = vmatprep.subr.mxu0 0.0
    %776 = vmatpush1.xpose.msra.mxu0 0.0
    %777 = vmatprep.subr.mxu0 0.0
    %778 = vmatpush1.xpose.msra.mxu0 0.0
    %779 = vmatprep.subr.mxu0 0.0
    %780 = vmatpush1.xpose.msra.mxu0 0.0
    %781 = vmatprep.subr.mxu0 0.0
    %782 = vmatpush1.xpose.msra.mxu0 0.0
    %783 = vmatprep.subr.mxu0 0.0
    %784 = vmatpush1.xpose.msra.mxu0 0.0
    %785 = vmatprep.subr.mxu0 0.0
    %786 = vmatpush1.xpose.msra.mxu0 0.0
    %787 = vmatprep.subr.mxu0 0.0
    %788 = vmatpush1.xpose.msra.mxu0 0.0
    %789 = vmatprep.subr.mxu0 0.0
    %790 = vmatpush1.xpose.msra.mxu0 0.0
    %791 = vmatprep.subr.mxu0 0.0
    %792 = vmatpush1.xpose.msra.mxu0 0.0
    %793 = vmatprep.subr.mxu0 0.0
    %794 = vmatpush1.xpose.msra.mxu0 0.0
    %795 = vmatprep.subr.mxu0 0.0
    %796 = vmatpush1.xpose.msra.mxu0 0.0
    %797 = vmatprep.subr.mxu0 0.0
    %798 = vmatpush1.xpose.msra.mxu0 0.0
    %799 = vmatprep.subr.mxu0 0.0
    %800 = vmatpush1.xpose.msra.mxu0 0.0
    %801 = vmatprep.subr.mxu0 0.0
    %802 = vmatpush1.xpose.msra.mxu0 0.0
    %803 = vmatprep.subr.mxu0 0.0
    %804 = vmatpush1.xpose.msra.mxu0 %v771
    %805 = vmatprep.subr.mxu0 0.0
    %806 = vmatpush2.xpose.msra.mxu0 0.0
    %807 = vmatprep.subr.mxu0 0.0
    %808 = vmatpush2.xpose.msra.mxu0 0.0
    %809 = vmatprep.subr.mxu0 0.0
    %810 = vmatpush2.xpose.msra.mxu0 0.0
    %811 = vmatprep.subr.mxu0 0.0
    %812 = vmatpush2.xpose.msra.mxu0 0.0
    %813 = vmatprep.subr.mxu0 0.0
    %814 = vmatpush2.xpose.msra.mxu0 0.0
    %815 = vmatprep.subr.mxu0 0.0
    %816 = vmatpush2.xpose.msra.mxu0 0.0
    %817 = vmatprep.subr.mxu0 0.0
    %818 = vmatpush2.xpose.msra.mxu0 0.0
    %819 = vmatprep.subr.mxu0 0.0
    %820 = vmatpush2.xpose.msra.mxu0 0.0
    %821 = vmatprep.subr.mxu0 0.0
    %822 = vmatpush2.xpose.msra.mxu0 0.0
    %823 = vmatprep.subr.mxu0 0.0
    %824 = vmatpush2.xpose.msra.mxu0 0.0
    %825 = vmatprep.subr.mxu0 0.0
    %826 = vmatpush2.xpose.msra.mxu0 0.0
    %827 = vmatprep.subr.mxu0 0.0
    %828 = vmatpush2.xpose.msra.mxu0 0.0
    %829 = vmatprep.subr.mxu0 0.0
    %830 = vmatpush2.xpose.msra.mxu0 0.0
    %831 = vmatprep.subr.mxu0 0.0
    %832 = vmatpush2.xpose.msra.mxu0 0.0
    %833 = vmatprep.subr.mxu0 0.0
    %834 = vmatpush2.xpose.msra.mxu0 0.0
    %835 = vmatprep.subr.mxu0 0.0
    %836 = vmatpush2.xpose.msra.mxu0 0.0
    %837 = vmatprep.mubr.f32.mxu0 0.0
    %838 = vmatmul.mubr.f32.gmra.mxu0 %v769
    %v839 = vpop.f32.mrf.mxu0
    %v840 = vadd.f32 0.0, %v839
    %v841 = vpop.f32.mrf.mxu0
    %842 = vdwg.mxu0
    %v843 = vsel %vm274, %v762, -inf
    %844 = vmax.xlane.f32.xlu0 %v843
    %v845 = vpop.xlane.xlu0 %844
    %v846 = vsel %vm274, %v840, -inf
    %847 = vmax.xlane.f32.xlu0 %v846
    %v848 = vpop.xlane.xlu0 %847
    %v849 = vsub.f32 %v762, %v845
    %v850 = vsub.f32 %v840, %v848
    %v851 = vmul.f32 %v849, 1.442695
    %v852 = vpow.pop %v851
    %v853 = vmul.f32 %v850, 1.442695
    %v854 = vpow.pop %v853
    %v855 = vsel %vm274, %v852, 0.0
    %856 = vadd.xlane.f32.xlu0 %v855
    %v857 = vpop.xlane.xlu0 %856
    %v858 = vsel %vm274, %v854, 0.0
    %859 = vadd.xlane.f32.xlu0 %v858
    %v860 = vpop.xlane.xlu0 %859
    %v861 = vrcp.pop %v857
    %v862 = vrcp.pop %v860
    %v863 = vmul.f32 %v852, %v861
    %v864 = vmul.f32 %v854, %v862
    %865 = vrot.lane.b32.xlu0 %v250, 56
    %v866 = vpop.permute.xlu0 %865
    %v869 = vsel %vm274, %v863, 0
    %871 = vmatprep.subr.mxu0 0.0
    %872 = vmatpush1.msra.mxu0 0.0
    %873 = vmatprep.subr.mxu0 0.0
    %874 = vmatpush1.msra.mxu0 0.0
    %875 = vmatprep.subr.mxu0 0.0
    %876 = vmatpush1.msra.mxu0 0.0
    %877 = vmatprep.subr.mxu0 0.0
    %878 = vmatpush1.msra.mxu0 0.0
    %879 = vmatprep.subr.mxu0 0.0
    %880 = vmatpush1.msra.mxu0 0.0
    %881 = vmatprep.subr.mxu0 0.0
    %882 = vmatpush1.msra.mxu0 0.0
    %883 = vmatprep.subr.mxu0 0.0
    %884 = vmatpush1.msra.mxu0 0.0
    %885 = vmatprep.subr.mxu0 0.0
    %886 = vmatpush1.msra.mxu0 0.0
    %887 = vmatprep.subr.mxu0 0.0
    %888 = vmatpush1.msra.mxu0 0.0
    %889 = vmatprep.subr.mxu0 0.0
    %890 = vmatpush1.msra.mxu0 0.0
    %891 = vmatprep.subr.mxu0 0.0
    %892 = vmatpush1.msra.mxu0 0.0
    %893 = vmatprep.subr.mxu0 0.0
    %894 = vmatpush1.msra.mxu0 0.0
    %895 = vmatprep.subr.mxu0 0.0
    %896 = vmatpush1.msra.mxu0 0.0
    %897 = vmatprep.subr.mxu0 0.0
    %898 = vmatpush1.msra.mxu0 0.0
    %899 = vmatprep.subr.mxu0 0.0
    %900 = vmatpush1.msra.mxu0 0.0
    %901 = vmatprep.subr.mxu0 0.0
    %902 = vmatpush1.msra.mxu0 %v866
    %903 = vmatprep.subr.mxu0 0.0
    %904 = vmatpush2.msra.mxu0 0.0
    %905 = vmatprep.subr.mxu0 0.0
    %906 = vmatpush2.msra.mxu0 0.0
    %907 = vmatprep.subr.mxu0 0.0
    %908 = vmatpush2.msra.mxu0 0.0
    %909 = vmatprep.subr.mxu0 0.0
    %910 = vmatpush2.msra.mxu0 0.0
    %911 = vmatprep.subr.mxu0 0.0
    %912 = vmatpush2.msra.mxu0 0.0
    %913 = vmatprep.subr.mxu0 0.0
    %914 = vmatpush2.msra.mxu0 0.0
    %915 = vmatprep.subr.mxu0 0.0
    %916 = vmatpush2.msra.mxu0 0.0
    %917 = vmatprep.subr.mxu0 0.0
    %918 = vmatpush2.msra.mxu0 0.0
    %919 = vmatprep.subr.mxu0 0.0
    %920 = vmatpush2.msra.mxu0 0.0
    %921 = vmatprep.subr.mxu0 0.0
    %922 = vmatpush2.msra.mxu0 0.0
    %923 = vmatprep.subr.mxu0 0.0
    %924 = vmatpush2.msra.mxu0 0.0
    %925 = vmatprep.subr.mxu0 0.0
    %926 = vmatpush2.msra.mxu0 0.0
    %927 = vmatprep.subr.mxu0 0.0
    %928 = vmatpush2.msra.mxu0 0.0
    %929 = vmatprep.subr.mxu0 0.0
    %930 = vmatpush2.msra.mxu0 0.0
    %931 = vmatprep.subr.mxu0 0.0
    %932 = vmatpush2.msra.mxu0 0.0
    %933 = vmatprep.subr.mxu0 0.0
    %934 = vmatpush2.msra.mxu0 0.0
    %935 = vmatprep.mubr.f32.mxu0 0.0
    %936 = vmatmul.mubr.f32.gmra.mxu0 %v869
    %v937 = vpop.f32.mrf.mxu0
    %v938 = vadd.f32 0.0, %v937
    %v939 = vpop.f32.mrf.mxu0
    %940 = vdwg.mxu0
    %941 = vrot.lane.b32.xlu0 %v255, 56
    %v942 = vpop.permute.xlu0 %941
    %v945 = vsel %vm274, %v864, 0
    %947 = vmatprep.subr.mxu0 0.0
    %948 = vmatpush1.msra.mxu0 0.0
    %949 = vmatprep.subr.mxu0 0.0
    %950 = vmatpush1.msra.mxu0 0.0
    %951 = vmatprep.subr.mxu0 0.0
    %952 = vmatpush1.msra.mxu0 0.0
    %953 = vmatprep.subr.mxu0 0.0
    %954 = vmatpush1.msra.mxu0 0.0
    %955 = vmatprep.subr.mxu0 0.0
    %956 = vmatpush1.msra.mxu0 0.0
    %957 = vmatprep.subr.mxu0 0.0
    %958 = vmatpush1.msra.mxu0 0.0
    %959 = vmatprep.subr.mxu0 0.0
    %960 = vmatpush1.msra.mxu0 0.0
    %961 = vmatprep.subr.mxu0 0.0
    %962 = vmatpush1.msra.mxu0 0.0
    %963 = vmatprep.subr.mxu0 0.0
    %964 = vmatpush1.msra.mxu0 0.0
    %965 = vmatprep.subr.mxu0 0.0
    %966 = vmatpush1.msra.mxu0 0.0
    %967 = vmatprep.subr.mxu0 0.0
    %968 = vmatpush1.msra.mxu0 0.0
    %969 = vmatprep.subr.mxu0 0.0
    %970 = vmatpush1.msra.mxu0 0.0
    %971 = vmatprep.subr.mxu0 0.0
    %972 = vmatpush1.msra.mxu0 0.0
    %973 = vmatprep.subr.mxu0 0.0
    %974 = vmatpush1.msra.mxu0 0.0
    %975 = vmatprep.subr.mxu0 0.0
    %976 = vmatpush1.msra.mxu0 0.0
    %977 = vmatprep.subr.mxu0 0.0
    %978 = vmatpush1.msra.mxu0 %v942
    %979 = vmatprep.subr.mxu0 0.0
    %980 = vmatpush2.msra.mxu0 0.0
    %981 = vmatprep.subr.mxu0 0.0
    %982 = vmatpush2.msra.mxu0 0.0
    %983 = vmatprep.subr.mxu0 0.0
    %984 = vmatpush2.msra.mxu0 0.0
    %985 = vmatprep.subr.mxu0 0.0
    %986 = vmatpush2.msra.mxu0 0.0
    %987 = vmatprep.subr.mxu0 0.0
    %988 = vmatpush2.msra.mxu0 0.0
    %989 = vmatprep.subr.mxu0 0.0
    %990 = vmatpush2.msra.mxu0 0.0
    %991 = vmatprep.subr.mxu0 0.0
    %992 = vmatpush2.msra.mxu0 0.0
    %993 = vmatprep.subr.mxu0 0.0
    %994 = vmatpush2.msra.mxu0 0.0
    %995 = vmatprep.subr.mxu0 0.0
    %996 = vmatpush2.msra.mxu0 0.0
    %997 = vmatprep.subr.mxu0 0.0
    %998 = vmatpush2.msra.mxu0 0.0
    %999 = vmatprep.subr.mxu0 0.0
    %1000 = vmatpush2.msra.mxu0 0.0
    %1001 = vmatprep.subr.mxu0 0.0
    %1002 = vmatpush2.msra.mxu0 0.0
    %1003 = vmatprep.subr.mxu0 0.0
    %1004 = vmatpush2.msra.mxu0 0.0
    %1005 = vmatprep.subr.mxu0 0.0
    %1006 = vmatpush2.msra.mxu0 0.0
    %1007 = vmatprep.subr.mxu0 0.0
    %1008 = vmatpush2.msra.mxu0 0.0
    %1009 = vmatprep.subr.mxu0 0.0
    %1010 = vmatpush2.msra.mxu0 0.0
    %1011 = vmatprep.mubr.f32.mxu0 0.0
    %1012 = vmatmul.mubr.f32.gmra.mxu0 %v945
    %v1013 = vpop.f32.mrf.mxu0
    %v1014 = vadd.f32 0.0, %v1013
    %v1015 = vpop.f32.mrf.mxu0
    %1016 = vdwg.mxu0
    %v1018 = vsel %vm274, %v938, 0
    %v1021 = vsel %vm274, %v1014, 0
    %1023 = vmatprep.subr.mxu0 0.0
    %1024 = vmatpush1.msra.mxu0 0.0
    %1025 = vmatprep.subr.mxu0 0.0
    %1026 = vmatpush1.msra.mxu0 0.0
    %1027 = vmatprep.subr.mxu0 0.0
    %1028 = vmatpush1.msra.mxu0 0.0
    %1029 = vmatprep.subr.mxu0 0.0
    %1030 = vmatpush1.msra.mxu0 0.0
    %1031 = vmatprep.subr.mxu0 0.0
    %1032 = vmatpush1.msra.mxu0 0.0
    %1033 = vmatprep.subr.mxu0 0.0
    %1034 = vmatpush1.msra.mxu0 0.0
    %1035 = vmatprep.subr.mxu0 0.0
    %1036 = vmatpush1.msra.mxu0 0.0
    %1037 = vmatprep.subr.mxu0 0.0
    %1038 = vmatpush1.msra.mxu0 0.0
    %1039 = vmatprep.subr.mxu0 0.0
    %1040 = vmatpush1.msra.mxu0 0.0
    %1041 = vmatprep.subr.mxu0 0.0
    %1042 = vmatpush1.msra.mxu0 0.0
    %1043 = vmatprep.subr.mxu0 0.0
    %1044 = vmatpush1.msra.mxu0 0.0
    %1045 = vmatprep.subr.mxu0 0.0
    %1046 = vmatpush1.msra.mxu0 0.0
    %1047 = vmatprep.subr.mxu0 0.0
    %1048 = vmatpush1.msra.mxu0 0.0
    %1049 = vmatprep.subr.mxu0 0.0
    %1050 = vmatpush1.msra.mxu0 0.0
    %1051 = vmatprep.subr.mxu0 0.0
    %1052 = vmatpush1.msra.mxu0 0.0
    %1053 = vmatprep.subr.mxu0 0.0
    %1054 = vmatpush1.msra.mxu0 %v262
    %1055 = vmatprep.subr.mxu0 0.0
    %1056 = vmatpush2.msra.mxu0 0.0
    %1057 = vmatprep.subr.mxu0 0.0
    %1058 = vmatpush2.msra.mxu0 0.0
    %1059 = vmatprep.subr.mxu0 0.0
    %1060 = vmatpush2.msra.mxu0 0.0
    %1061 = vmatprep.subr.mxu0 0.0
    %1062 = vmatpush2.msra.mxu0 0.0
    %1063 = vmatprep.subr.mxu0 0.0
    %1064 = vmatpush2.msra.mxu0 0.0
    %1065 = vmatprep.subr.mxu0 0.0
    %1066 = vmatpush2.msra.mxu0 0.0
    %1067 = vmatprep.subr.mxu0 0.0
    %1068 = vmatpush2.msra.mxu0 0.0
    %1069 = vmatprep.subr.mxu0 0.0
    %1070 = vmatpush2.msra.mxu0 0.0
    %1071 = vmatprep.subr.mxu0 0.0
    %1072 = vmatpush2.msra.mxu0 0.0
    %1073 = vmatprep.subr.mxu0 0.0
    %1074 = vmatpush2.msra.mxu0 0.0
    %1075 = vmatprep.subr.mxu0 0.0
    %1076 = vmatpush2.msra.mxu0 0.0
    %1077 = vmatprep.subr.mxu0 0.0
    %1078 = vmatpush2.msra.mxu0 0.0
    %1079 = vmatprep.subr.mxu0 0.0
    %1080 = vmatpush2.msra.mxu0 0.0
    %1081 = vmatprep.subr.mxu0 0.0
    %1082 = vmatpush2.msra.mxu0 0.0
    %1083 = vmatprep.subr.mxu0 0.0
    %1084 = vmatpush2.msra.mxu0 0.0
    %1085 = vmatprep.subr.mxu0 0.0
    %1086 = vmatpush2.msra.mxu0 0.0
    %1087 = vmatprep.mubr.f32.mxu0 0.0
    %1088 = vmatmul.mubr.f32.gmra.mxu0 %v1018
    %v1089 = vpop.f32.mrf.mxu0
    %v1090 = vadd.f32 0.0, %v1089
    %v1091 = vpop.f32.mrf.mxu0
    %1092 = vmatprep.mubr.f32.mxu0 0.0
    %1093 = vmatmul.mubr.f32.gmra.mxu0 %v1021
    %v1094 = vpop.f32.mrf.mxu0
    %v1095 = vadd.f32 0.0, %v1094
    %v1096 = vpop.f32.mrf.mxu0
    %1097 = vdwg.mxu0
    %v1098 = vadd.f32 %v685, %v1090
    %v1099 = vadd.f32 %v686, %v1095
    %1100 = vrot.lane.b32.xlu0 %v258, 112
    %v1101 = vpop.permute.xlu0 %1100
    %1102 = vrot.lane.b32.xlu0 %v240, 80
    %v1103 = vpop.permute.xlu0 %1102
    %v1104 = vsel %vm274, %v1101, 0
    %v1106 = vsel %vm274, %v1103, 0
    %1108 = vmatprep.subr.mxu0 0.0
    %1109 = vmatpush1.xpose.msra.mxu0 0.0
    %1110 = vmatprep.subr.mxu0 0.0
    %1111 = vmatpush1.xpose.msra.mxu0 0.0
    %1112 = vmatprep.subr.mxu0 0.0
    %1113 = vmatpush1.xpose.msra.mxu0 0.0
    %1114 = vmatprep.subr.mxu0 0.0
    %1115 = vmatpush1.xpose.msra.mxu0 0.0
    %1116 = vmatprep.subr.mxu0 0.0
    %1117 = vmatpush1.xpose.msra.mxu0 0.0
    %1118 = vmatprep.subr.mxu0 0.0
    %1119 = vmatpush1.xpose.msra.mxu0 0.0
    %1120 = vmatprep.subr.mxu0 0.0
    %1121 = vmatpush1.xpose.msra.mxu0 0.0
    %1122 = vmatprep.subr.mxu0 0.0
    %1123 = vmatpush1.xpose.msra.mxu0 0.0
    %1124 = vmatprep.subr.mxu0 0.0
    %1125 = vmatpush1.xpose.msra.mxu0 0.0
    %1126 = vmatprep.subr.mxu0 0.0
    %1127 = vmatpush1.xpose.msra.mxu0 0.0
    %1128 = vmatprep.subr.mxu0 0.0
    %1129 = vmatpush1.xpose.msra.mxu0 0.0
    %1130 = vmatprep.subr.mxu0 0.0
    %1131 = vmatpush1.xpose.msra.mxu0 0.0
    %1132 = vmatprep.subr.mxu0 0.0
    %1133 = vmatpush1.xpose.msra.mxu0 0.0
    %1134 = vmatprep.subr.mxu0 0.0
    %1135 = vmatpush1.xpose.msra.mxu0 0.0
    %1136 = vmatprep.subr.mxu0 0.0
    %1137 = vmatpush1.xpose.msra.mxu0 0.0
    %1138 = vmatprep.subr.mxu0 0.0
    %1139 = vmatpush1.xpose.msra.mxu0 %v1106
    %1140 = vmatprep.subr.mxu0 0.0
    %1141 = vmatpush2.xpose.msra.mxu0 0.0
    %1142 = vmatprep.subr.mxu0 0.0
    %1143 = vmatpush2.xpose.msra.mxu0 0.0
    %1144 = vmatprep.subr.mxu0 0.0
    %1145 = vmatpush2.xpose.msra.mxu0 0.0
    %1146 = vmatprep.subr.mxu0 0.0
    %1147 = vmatpush2.xpose.msra.mxu0 0.0
    %1148 = vmatprep.subr.mxu0 0.0
    %1149 = vmatpush2.xpose.msra.mxu0 0.0
    %1150 = vmatprep.subr.mxu0 0.0
    %1151 = vmatpush2.xpose.msra.mxu0 0.0
    %1152 = vmatprep.subr.mxu0 0.0
    %1153 = vmatpush2.xpose.msra.mxu0 0.0
    %1154 = vmatprep.subr.mxu0 0.0
    %1155 = vmatpush2.xpose.msra.mxu0 0.0
    %1156 = vmatprep.subr.mxu0 0.0
    %1157 = vmatpush2.xpose.msra.mxu0 0.0
    %1158 = vmatprep.subr.mxu0 0.0
    %1159 = vmatpush2.xpose.msra.mxu0 0.0
    %1160 = vmatprep.subr.mxu0 0.0
    %1161 = vmatpush2.xpose.msra.mxu0 0.0
    %1162 = vmatprep.subr.mxu0 0.0
    %1163 = vmatpush2.xpose.msra.mxu0 0.0
    %1164 = vmatprep.subr.mxu0 0.0
    %1165 = vmatpush2.xpose.msra.mxu0 0.0
    %1166 = vmatprep.subr.mxu0 0.0
    %1167 = vmatpush2.xpose.msra.mxu0 0.0
    %1168 = vmatprep.subr.mxu0 0.0
    %1169 = vmatpush2.xpose.msra.mxu0 0.0
    %1170 = vmatprep.subr.mxu0 0.0
    %1171 = vmatpush2.xpose.msra.mxu0 0.0
    %1172 = vmatprep.mubr.f32.mxu0 0.0
    %1173 = vmatmul.mubr.f32.gmra.mxu0 %v1104
    %v1174 = vpop.f32.mrf.mxu0
    %v1175 = vadd.f32 0.0, %v1174
    %v1176 = vpop.f32.mrf.mxu0
    %1177 = vdwg.mxu0
    %1178 = vrot.lane.b32.xlu0 %v259, 112
    %v1179 = vpop.permute.xlu0 %1178
    %1180 = vrot.lane.b32.xlu0 %v245, 80
    %v1181 = vpop.permute.xlu0 %1180
    %v1182 = vsel %vm274, %v1179, 0
    %v1184 = vsel %vm274, %v1181, 0
    %1186 = vmatprep.subr.mxu0 0.0
    %1187 = vmatpush1.xpose.msra.mxu0 0.0
    %1188 = vmatprep.subr.mxu0 0.0
    %1189 = vmatpush1.xpose.msra.mxu0 0.0
    %1190 = vmatprep.subr.mxu0 0.0
    %1191 = vmatpush1.xpose.msra.mxu0 0.0
    %1192 = vmatprep.subr.mxu0 0.0
    %1193 = vmatpush1.xpose.msra.mxu0 0.0
    %1194 = vmatprep.subr.mxu0 0.0
    %1195 = vmatpush1.xpose.msra.mxu0 0.0
    %1196 = vmatprep.subr.mxu0 0.0
    %1197 = vmatpush1.xpose.msra.mxu0 0.0
    %1198 = vmatprep.subr.mxu0 0.0
    %1199 = vmatpush1.xpose.msra.mxu0 0.0
    %1200 = vmatprep.subr.mxu0 0.0
    %1201 = vmatpush1.xpose.msra.mxu0 0.0
    %1202 = vmatprep.subr.mxu0 0.0
    %1203 = vmatpush1.xpose.msra.mxu0 0.0
    %1204 = vmatprep.subr.mxu0 0.0
    %1205 = vmatpush1.xpose.msra.mxu0 0.0
    %1206 = vmatprep.subr.mxu0 0.0
    %1207 = vmatpush1.xpose.msra.mxu0 0.0
    %1208 = vmatprep.subr.mxu0 0.0
    %1209 = vmatpush1.xpose.msra.mxu0 0.0
    %1210 = vmatprep.subr.mxu0 0.0
    %1211 = vmatpush1.xpose.msra.mxu0 0.0
    %1212 = vmatprep.subr.mxu0 0.0
    %1213 = vmatpush1.xpose.msra.mxu0 0.0
    %1214 = vmatprep.subr.mxu0 0.0
    %1215 = vmatpush1.xpose.msra.mxu0 0.0
    %1216 = vmatprep.subr.mxu0 0.0
    %1217 = vmatpush1.xpose.msra.mxu0 %v1184
    %1218 = vmatprep.subr.mxu0 0.0
    %1219 = vmatpush2.xpose.msra.mxu0 0.0
    %1220 = vmatprep.subr.mxu0 0.0
    %1221 = vmatpush2.xpose.msra.mxu0 0.0
    %1222 = vmatprep.subr.mxu0 0.0
    %1223 = vmatpush2.xpose.msra.mxu0 0.0
    %1224 = vmatprep.subr.mxu0 0.0
    %1225 = vmatpush2.xpose.msra.mxu0 0.0
    %1226 = vmatprep.subr.mxu0 0.0
    %1227 = vmatpush2.xpose.msra.mxu0 0.0
    %1228 = vmatprep.subr.mxu0 0.0
    %1229 = vmatpush2.xpose.msra.mxu0 0.0
    %1230 = vmatprep.subr.mxu0 0.0
    %1231 = vmatpush2.xpose.msra.mxu0 0.0
    %1232 = vmatprep.subr.mxu0 0.0
    %1233 = vmatpush2.xpose.msra.mxu0 0.0
    %1234 = vmatprep.subr.mxu0 0.0
    %1235 = vmatpush2.xpose.msra.mxu0 0.0
    %1236 = vmatprep.subr.mxu0 0.0
    %1237 = vmatpush2.xpose.msra.mxu0 0.0
    %1238 = vmatprep.subr.mxu0 0.0
    %1239 = vmatpush2.xpose.msra.mxu0 0.0
    %1240 = vmatprep.subr.mxu0 0.0
    %1241 = vmatpush2.xpose.msra.mxu0 0.0
    %1242 = vmatprep.subr.mxu0 0.0
    %1243 = vmatpush2.xpose.msra.mxu0 0.0
    %1244 = vmatprep.subr.mxu0 0.0
    %1245 = vmatpush2.xpose.msra.mxu0 0.0
    %1246 = vmatprep.subr.mxu0 0.0
    %1247 = vmatpush2.xpose.msra.mxu0 0.0
    %1248 = vmatprep.subr.mxu0 0.0
    %1249 = vmatpush2.xpose.msra.mxu0 0.0
    %1250 = vmatprep.mubr.f32.mxu0 0.0
    %1251 = vmatmul.mubr.f32.gmra.mxu0 %v1182
    %v1252 = vpop.f32.mrf.mxu0
    %v1253 = vadd.f32 0.0, %v1252
    %v1254 = vpop.f32.mrf.mxu0
    %1255 = vdwg.mxu0
    %v1256 = vsel %vm274, %v1175, -inf
    %1257 = vmax.xlane.f32.xlu0 %v1256
    %v1258 = vpop.xlane.xlu0 %1257
    %v1259 = vsel %vm274, %v1253, -inf
    %1260 = vmax.xlane.f32.xlu0 %v1259
    %v1261 = vpop.xlane.xlu0 %1260
    %v1262 = vsub.f32 %v1175, %v1258
    %v1263 = vsub.f32 %v1253, %v1261
    %v1264 = vmul.f32 %v1262, 1.442695
    %v1265 = vpow.pop %v1264
    %v1266 = vmul.f32 %v1263, 1.442695
    %v1267 = vpow.pop %v1266
    %v1268 = vsel %vm274, %v1265, 0.0
    %1269 = vadd.xlane.f32.xlu0 %v1268
    %v1270 = vpop.xlane.xlu0 %1269
    %v1271 = vsel %vm274, %v1267, 0.0
    %1272 = vadd.xlane.f32.xlu0 %v1271
    %v1273 = vpop.xlane.xlu0 %1272
    %v1274 = vrcp.pop %v1270
    %v1275 = vrcp.pop %v1273
    %v1276 = vmul.f32 %v1265, %v1274
    %v1277 = vmul.f32 %v1267, %v1275
    %1278 = vrot.lane.b32.xlu0 %v250, 48
    %v1279 = vpop.permute.xlu0 %1278
    %v1282 = vsel %vm274, %v1276, 0
    %1284 = vmatprep.subr.mxu0 0.0
    %1285 = vmatpush1.msra.mxu0 0.0
    %1286 = vmatprep.subr.mxu0 0.0
    %1287 = vmatpush1.msra.mxu0 0.0
    %1288 = vmatprep.subr.mxu0 0.0
    %1289 = vmatpush1.msra.mxu0 0.0
    %1290 = vmatprep.subr.mxu0 0.0
    %1291 = vmatpush1.msra.mxu0 0.0
    %1292 = vmatprep.subr.mxu0 0.0
    %1293 = vmatpush1.msra.mxu0 0.0
    %1294 = vmatprep.subr.mxu0 0.0
    %1295 = vmatpush1.msra.mxu0 0.0
    %1296 = vmatprep.subr.mxu0 0.0
    %1297 = vmatpush1.msra.mxu0 0.0
    %1298 = vmatprep.subr.mxu0 0.0
    %1299 = vmatpush1.msra.mxu0 0.0
    %1300 = vmatprep.subr.mxu0 0.0
    %1301 = vmatpush1.msra.mxu0 0.0
    %1302 = vmatprep.subr.mxu0 0.0
    %1303 = vmatpush1.msra.mxu0 0.0
    %1304 = vmatprep.subr.mxu0 0.0
    %1305 = vmatpush1.msra.mxu0 0.0
    %1306 = vmatprep.subr.mxu0 0.0
    %1307 = vmatpush1.msra.mxu0 0.0
    %1308 = vmatprep.subr.mxu0 0.0
    %1309 = vmatpush1.msra.mxu0 0.0
    %1310 = vmatprep.subr.mxu0 0.0
    %1311 = vmatpush1.msra.mxu0 0.0
    %1312 = vmatprep.subr.mxu0 0.0
    %1313 = vmatpush1.msra.mxu0 0.0
    %1314 = vmatprep.subr.mxu0 0.0
    %1315 = vmatpush1.msra.mxu0 %v1279
    %1316 = vmatprep.subr.mxu0 0.0
    %1317 = vmatpush2.msra.mxu0 0.0
    %1318 = vmatprep.subr.mxu0 0.0
    %1319 = vmatpush2.msra.mxu0 0.0
    %1320 = vmatprep.subr.mxu0 0.0
    %1321 = vmatpush2.msra.mxu0 0.0
    %1322 = vmatprep.subr.mxu0 0.0
    %1323 = vmatpush2.msra.mxu0 0.0
    %1324 = vmatprep.subr.mxu0 0.0
    %1325 = vmatpush2.msra.mxu0 0.0
    %1326 = vmatprep.subr.mxu0 0.0
    %1327 = vmatpush2.msra.mxu0 0.0
    %1328 = vmatprep.subr.mxu0 0.0
    %1329 = vmatpush2.msra.mxu0 0.0
    %1330 = vmatprep.subr.mxu0 0.0
    %1331 = vmatpush2.msra.mxu0 0.0
    %1332 = vmatprep.subr.mxu0 0.0
    %1333 = vmatpush2.msra.mxu0 0.0
    %1334 = vmatprep.subr.mxu0 0.0
    %1335 = vmatpush2.msra.mxu0 0.0
    %1336 = vmatprep.subr.mxu0 0.0
    %1337 = vmatpush2.msra.mxu0 0.0
    %1338 = vmatprep.subr.mxu0 0.0
    %1339 = vmatpush2.msra.mxu0 0.0
    %1340 = vmatprep.subr.mxu0 0.0
    %1341 = vmatpush2.msra.mxu0 0.0
    %1342 = vmatprep.subr.mxu0 0.0
    %1343 = vmatpush2.msra.mxu0 0.0
    %1344 = vmatprep.subr.mxu0 0.0
    %1345 = vmatpush2.msra.mxu0 0.0
    %1346 = vmatprep.subr.mxu0 0.0
    %1347 = vmatpush2.msra.mxu0 0.0
    %1348 = vmatprep.mubr.f32.mxu0 0.0
    %1349 = vmatmul.mubr.f32.gmra.mxu0 %v1282
    %v1350 = vpop.f32.mrf.mxu0
    %v1351 = vadd.f32 0.0, %v1350
    %v1352 = vpop.f32.mrf.mxu0
    %1353 = vdwg.mxu0
    %1354 = vrot.lane.b32.xlu0 %v255, 48
    %v1355 = vpop.permute.xlu0 %1354
    %v1358 = vsel %vm274, %v1277, 0
    %1360 = vmatprep.subr.mxu0 0.0
    %1361 = vmatpush1.msra.mxu0 0.0
    %1362 = vmatprep.subr.mxu0 0.0
    %1363 = vmatpush1.msra.mxu0 0.0
    %1364 = vmatprep.subr.mxu0 0.0
    %1365 = vmatpush1.msra.mxu0 0.0
    %1366 = vmatprep.subr.mxu0 0.0
    %1367 = vmatpush1.msra.mxu0 0.0
    %1368 = vmatprep.subr.mxu0 0.0
    %1369 = vmatpush1.msra.mxu0 0.0
    %1370 = vmatprep.subr.mxu0 0.0
    %1371 = vmatpush1.msra.mxu0 0.0
    %1372 = vmatprep.subr.mxu0 0.0
    %1373 = vmatpush1.msra.mxu0 0.0
    %1374 = vmatprep.subr.mxu0 0.0
    %1375 = vmatpush1.msra.mxu0 0.0
    %1376 = vmatprep.subr.mxu0 0.0
    %1377 = vmatpush1.msra.mxu0 0.0
    %1378 = vmatprep.subr.mxu0 0.0
    %1379 = vmatpush1.msra.mxu0 0.0
    %1380 = vmatprep.subr.mxu0 0.0
    %1381 = vmatpush1.msra.mxu0 0.0
    %1382 = vmatprep.subr.mxu0 0.0
    %1383 = vmatpush1.msra.mxu0 0.0
    %1384 = vmatprep.subr.mxu0 0.0
    %1385 = vmatpush1.msra.mxu0 0.0
    %1386 = vmatprep.subr.mxu0 0.0
    %1387 = vmatpush1.msra.mxu0 0.0
    %1388 = vmatprep.subr.mxu0 0.0
    %1389 = vmatpush1.msra.mxu0 0.0
    %1390 = vmatprep.subr.mxu0 0.0
    %1391 = vmatpush1.msra.mxu0 %v1355
    %1392 = vmatprep.subr.mxu0 0.0
    %1393 = vmatpush2.msra.mxu0 0.0
    %1394 = vmatprep.subr.mxu0 0.0
    %1395 = vmatpush2.msra.mxu0 0.0
    %1396 = vmatprep.subr.mxu0 0.0
    %1397 = vmatpush2.msra.mxu0 0.0
    %1398 = vmatprep.subr.mxu0 0.0
    %1399 = vmatpush2.msra.mxu0 0.0
    %1400 = vmatprep.subr.mxu0 0.0
    %1401 = vmatpush2.msra.mxu0 0.0
    %1402 = vmatprep.subr.mxu0 0.0
    %1403 = vmatpush2.msra.mxu0 0.0
    %1404 = vmatprep.subr.mxu0 0.0
    %1405 = vmatpush2.msra.mxu0 0.0
    %1406 = vmatprep.subr.mxu0 0.0
    %1407 = vmatpush2.msra.mxu0 0.0
    %1408 = vmatprep.subr.mxu0 0.0
    %1409 = vmatpush2.msra.mxu0 0.0
    %1410 = vmatprep.subr.mxu0 0.0
    %1411 = vmatpush2.msra.mxu0 0.0
    %1412 = vmatprep.subr.mxu0 0.0
    %1413 = vmatpush2.msra.mxu0 0.0
    %1414 = vmatprep.subr.mxu0 0.0
    %1415 = vmatpush2.msra.mxu0 0.0
    %1416 = vmatprep.subr.mxu0 0.0
    %1417 = vmatpush2.msra.mxu0 0.0
    %1418 = vmatprep.subr.mxu0 0.0
    %1419 = vmatpush2.msra.mxu0 0.0
    %1420 = vmatprep.subr.mxu0 0.0
    %1421 = vmatpush2.msra.mxu0 0.0
    %1422 = vmatprep.subr.mxu0 0.0
    %1423 = vmatpush2.msra.mxu0 0.0
    %1424 = vmatprep.mubr.f32.mxu0 0.0
    %1425 = vmatmul.mubr.f32.gmra.mxu0 %v1358
    %v1426 = vpop.f32.mrf.mxu0
    %v1427 = vadd.f32 0.0, %v1426
    %v1428 = vpop.f32.mrf.mxu0
    %1429 = vdwg.mxu0
    %v1431 = vsel %vm274, %v1351, 0
    %v1434 = vsel %vm274, %v1427, 0
    %1436 = vmatprep.subr.mxu0 0.0
    %1437 = vmatpush1.msra.mxu0 0.0
    %1438 = vmatprep.subr.mxu0 0.0
    %1439 = vmatpush1.msra.mxu0 0.0
    %1440 = vmatprep.subr.mxu0 0.0
    %1441 = vmatpush1.msra.mxu0 0.0
    %1442 = vmatprep.subr.mxu0 0.0
    %1443 = vmatpush1.msra.mxu0 0.0
    %1444 = vmatprep.subr.mxu0 0.0
    %1445 = vmatpush1.msra.mxu0 0.0
    %1446 = vmatprep.subr.mxu0 0.0
    %1447 = vmatpush1.msra.mxu0 0.0
    %1448 = vmatprep.subr.mxu0 0.0
    %1449 = vmatpush1.msra.mxu0 0.0
    %1450 = vmatprep.subr.mxu0 0.0
    %1451 = vmatpush1.msra.mxu0 0.0
    %1452 = vmatprep.subr.mxu0 0.0
    %1453 = vmatpush1.msra.mxu0 0.0
    %1454 = vmatprep.subr.mxu0 0.0
    %1455 = vmatpush1.msra.mxu0 0.0
    %1456 = vmatprep.subr.mxu0 0.0
    %1457 = vmatpush1.msra.mxu0 0.0
    %1458 = vmatprep.subr.mxu0 0.0
    %1459 = vmatpush1.msra.mxu0 0.0
    %1460 = vmatprep.subr.mxu0 0.0
    %1461 = vmatpush1.msra.mxu0 0.0
    %1462 = vmatprep.subr.mxu0 0.0
    %1463 = vmatpush1.msra.mxu0 0.0
    %1464 = vmatprep.subr.mxu0 0.0
    %1465 = vmatpush1.msra.mxu0 0.0
    %1466 = vmatprep.subr.mxu0 0.0
    %1467 = vmatpush1.msra.mxu0 %v263
    %1468 = vmatprep.subr.mxu0 0.0
    %1469 = vmatpush2.msra.mxu0 0.0
    %1470 = vmatprep.subr.mxu0 0.0
    %1471 = vmatpush2.msra.mxu0 0.0
    %1472 = vmatprep.subr.mxu0 0.0
    %1473 = vmatpush2.msra.mxu0 0.0
    %1474 = vmatprep.subr.mxu0 0.0
    %1475 = vmatpush2.msra.mxu0 0.0
    %1476 = vmatprep.subr.mxu0 0.0
    %1477 = vmatpush2.msra.mxu0 0.0
    %1478 = vmatprep.subr.mxu0 0.0
    %1479 = vmatpush2.msra.mxu0 0.0
    %1480 = vmatprep.subr.mxu0 0.0
    %1481 = vmatpush2.msra.mxu0 0.0
    %1482 = vmatprep.subr.mxu0 0.0
    %1483 = vmatpush2.msra.mxu0 0.0
    %1484 = vmatprep.subr.mxu0 0.0
    %1485 = vmatpush2.msra.mxu0 0.0
    %1486 = vmatprep.subr.mxu0 0.0
    %1487 = vmatpush2.msra.mxu0 0.0
    %1488 = vmatprep.subr.mxu0 0.0
    %1489 = vmatpush2.msra.mxu0 0.0
    %1490 = vmatprep.subr.mxu0 0.0
    %1491 = vmatpush2.msra.mxu0 0.0
    %1492 = vmatprep.subr.mxu0 0.0
    %1493 = vmatpush2.msra.mxu0 0.0
    %1494 = vmatprep.subr.mxu0 0.0
    %1495 = vmatpush2.msra.mxu0 0.0
    %1496 = vmatprep.subr.mxu0 0.0
    %1497 = vmatpush2.msra.mxu0 0.0
    %1498 = vmatprep.subr.mxu0 0.0
    %1499 = vmatpush2.msra.mxu0 0.0
    %1500 = vmatprep.mubr.f32.mxu0 0.0
    %1501 = vmatmul.mubr.f32.gmra.mxu0 %v1431
    %v1502 = vpop.f32.mrf.mxu0
    %v1503 = vadd.f32 0.0, %v1502
    %v1504 = vpop.f32.mrf.mxu0
    %1505 = vmatprep.mubr.f32.mxu0 0.0
    %1506 = vmatmul.mubr.f32.gmra.mxu0 %v1434
    %v1507 = vpop.f32.mrf.mxu0
    %v1508 = vadd.f32 0.0, %v1507
    %v1509 = vpop.f32.mrf.mxu0
    %1510 = vdwg.mxu0
    %v1511 = vadd.f32 %v1098, %v1503
    %v1512 = vadd.f32 %v1099, %v1508
    %1513 = vrot.lane.b32.xlu0 %v258, 104
    %v1514 = vpop.permute.xlu0 %1513
    %1515 = vrot.lane.b32.xlu0 %v240, 72
    %v1516 = vpop.permute.xlu0 %1515
    %v1517 = vsel %vm274, %v1514, 0
    %v1519 = vsel %vm274, %v1516, 0
    %1521 = vmatprep.subr.mxu0 0.0
    %1522 = vmatpush1.xpose.msra.mxu0 0.0
    %1523 = vmatprep.subr.mxu0 0.0
    %1524 = vmatpush1.xpose.msra.mxu0 0.0
    %1525 = vmatprep.subr.mxu0 0.0
    %1526 = vmatpush1.xpose.msra.mxu0 0.0
    %1527 = vmatprep.subr.mxu0 0.0
    %1528 = vmatpush1.xpose.msra.mxu0 0.0
    %1529 = vmatprep.subr.mxu0 0.0
    %1530 = vmatpush1.xpose.msra.mxu0 0.0
    %1531 = vmatprep.subr.mxu0 0.0
    %1532 = vmatpush1.xpose.msra.mxu0 0.0
    %1533 = vmatprep.subr.mxu0 0.0
    %1534 = vmatpush1.xpose.msra.mxu0 0.0
    %1535 = vmatprep.subr.mxu0 0.0
    %1536 = vmatpush1.xpose.msra.mxu0 0.0
    %1537 = vmatprep.subr.mxu0 0.0
    %1538 = vmatpush1.xpose.msra.mxu0 0.0
    %1539 = vmatprep.subr.mxu0 0.0
    %1540 = vmatpush1.xpose.msra.mxu0 0.0
    %1541 = vmatprep.subr.mxu0 0.0
    %1542 = vmatpush1.xpose.msra.mxu0 0.0
    %1543 = vmatprep.subr.mxu0 0.0
    %1544 = vmatpush1.xpose.msra.mxu0 0.0
    %1545 = vmatprep.subr.mxu0 0.0
    %1546 = vmatpush1.xpose.msra.mxu0 0.0
    %1547 = vmatprep.subr.mxu0 0.0
    %1548 = vmatpush1.xpose.msra.mxu0 0.0
    %1549 = vmatprep.subr.mxu0 0.0
    %1550 = vmatpush1.xpose.msra.mxu0 0.0
    %1551 = vmatprep.subr.mxu0 0.0
    %1552 = vmatpush1.xpose.msra.mxu0 %v1519
    %1553 = vmatprep.subr.mxu0 0.0
    %1554 = vmatpush2.xpose.msra.mxu0 0.0
    %1555 = vmatprep.subr.mxu0 0.0
    %1556 = vmatpush2.xpose.msra.mxu0 0.0
    %1557 = vmatprep.subr.mxu0 0.0
    %1558 = vmatpush2.xpose.msra.mxu0 0.0
    %1559 = vmatprep.subr.mxu0 0.0
    %1560 = vmatpush2.xpose.msra.mxu0 0.0
    %1561 = vmatprep.subr.mxu0 0.0
    %1562 = vmatpush2.xpose.msra.mxu0 0.0
    %1563 = vmatprep.subr.mxu0 0.0
    %1564 = vmatpush2.xpose.msra.mxu0 0.0
    %1565 = vmatprep.subr.mxu0 0.0
    %1566 = vmatpush2.xpose.msra.mxu0 0.0
    %1567 = vmatprep.subr.mxu0 0.0
    %1568 = vmatpush2.xpose.msra.mxu0 0.0
    %1569 = vmatprep.subr.mxu0 0.0
    %1570 = vmatpush2.xpose.msra.mxu0 0.0
    %1571 = vmatprep.subr.mxu0 0.0
    %1572 = vmatpush2.xpose.msra.mxu0 0.0
    %1573 = vmatprep.subr.mxu0 0.0
    %1574 = vmatpush2.xpose.msra.mxu0 0.0
    %1575 = vmatprep.subr.mxu0 0.0
    %1576 = vmatpush2.xpose.msra.mxu0 0.0
    %1577 = vmatprep.subr.mxu0 0.0
    %1578 = vmatpush2.xpose.msra.mxu0 0.0
    %1579 = vmatprep.subr.mxu0 0.0
    %1580 = vmatpush2.xpose.msra.mxu0 0.0
    %1581 = vmatprep.subr.mxu0 0.0
    %1582 = vmatpush2.xpose.msra.mxu0 0.0
    %1583 = vmatprep.subr.mxu0 0.0
    %1584 = vmatpush2.xpose.msra.mxu0 0.0
    %1585 = vmatprep.mubr.f32.mxu0 0.0
    %1586 = vmatmul.mubr.f32.gmra.mxu0 %v1517
    %v1587 = vpop.f32.mrf.mxu0
    %v1588 = vadd.f32 0.0, %v1587
    %v1589 = vpop.f32.mrf.mxu0
    %1590 = vdwg.mxu0
    %1591 = vrot.lane.b32.xlu0 %v259, 104
    %v1592 = vpop.permute.xlu0 %1591
    %1593 = vrot.lane.b32.xlu0 %v245, 72
    %v1594 = vpop.permute.xlu0 %1593
    %v1595 = vsel %vm274, %v1592, 0
    %v1597 = vsel %vm274, %v1594, 0
    %1599 = vmatprep.subr.mxu0 0.0
    %1600 = vmatpush1.xpose.msra.mxu0 0.0
    %1601 = vmatprep.subr.mxu0 0.0
    %1602 = vmatpush1.xpose.msra.mxu0 0.0
    %1603 = vmatprep.subr.mxu0 0.0
    %1604 = vmatpush1.xpose.msra.mxu0 0.0
    %1605 = vmatprep.subr.mxu0 0.0
    %1606 = vmatpush1.xpose.msra.mxu0 0.0
    %1607 = vmatprep.subr.mxu0 0.0
    %1608 = vmatpush1.xpose.msra.mxu0 0.0
    %1609 = vmatprep.subr.mxu0 0.0
    %1610 = vmatpush1.xpose.msra.mxu0 0.0
    %1611 = vmatprep.subr.mxu0 0.0
    %1612 = vmatpush1.xpose.msra.mxu0 0.0
    %1613 = vmatprep.subr.mxu0 0.0
    %1614 = vmatpush1.xpose.msra.mxu0 0.0
    %1615 = vmatprep.subr.mxu0 0.0
    %1616 = vmatpush1.xpose.msra.mxu0 0.0
    %1617 = vmatprep.subr.mxu0 0.0
    %1618 = vmatpush1.xpose.msra.mxu0 0.0
    %1619 = vmatprep.subr.mxu0 0.0
    %1620 = vmatpush1.xpose.msra.mxu0 0.0
    %1621 = vmatprep.subr.mxu0 0.0
    %1622 = vmatpush1.xpose.msra.mxu0 0.0
    %1623 = vmatprep.subr.mxu0 0.0
    %1624 = vmatpush1.xpose.msra.mxu0 0.0
    %1625 = vmatprep.subr.mxu0 0.0
    %1626 = vmatpush1.xpose.msra.mxu0 0.0
    %1627 = vmatprep.subr.mxu0 0.0
    %1628 = vmatpush1.xpose.msra.mxu0 0.0
    %1629 = vmatprep.subr.mxu0 0.0
    %1630 = vmatpush1.xpose.msra.mxu0 %v1597
    %1631 = vmatprep.subr.mxu0 0.0
    %1632 = vmatpush2.xpose.msra.mxu0 0.0
    %1633 = vmatprep.subr.mxu0 0.0
    %1634 = vmatpush2.xpose.msra.mxu0 0.0
    %1635 = vmatprep.subr.mxu0 0.0
    %1636 = vmatpush2.xpose.msra.mxu0 0.0
    %1637 = vmatprep.subr.mxu0 0.0
    %1638 = vmatpush2.xpose.msra.mxu0 0.0
    %1639 = vmatprep.subr.mxu0 0.0
    %1640 = vmatpush2.xpose.msra.mxu0 0.0
    %1641 = vmatprep.subr.mxu0 0.0
    %1642 = vmatpush2.xpose.msra.mxu0 0.0
    %1643 = vmatprep.subr.mxu0 0.0
    %1644 = vmatpush2.xpose.msra.mxu0 0.0
    %1645 = vmatprep.subr.mxu0 0.0
    %1646 = vmatpush2.xpose.msra.mxu0 0.0
    %1647 = vmatprep.subr.mxu0 0.0
    %1648 = vmatpush2.xpose.msra.mxu0 0.0
    %1649 = vmatprep.subr.mxu0 0.0
    %1650 = vmatpush2.xpose.msra.mxu0 0.0
    %1651 = vmatprep.subr.mxu0 0.0
    %1652 = vmatpush2.xpose.msra.mxu0 0.0
    %1653 = vmatprep.subr.mxu0 0.0
    %1654 = vmatpush2.xpose.msra.mxu0 0.0
    %1655 = vmatprep.subr.mxu0 0.0
    %1656 = vmatpush2.xpose.msra.mxu0 0.0
    %1657 = vmatprep.subr.mxu0 0.0
    %1658 = vmatpush2.xpose.msra.mxu0 0.0
    %1659 = vmatprep.subr.mxu0 0.0
    %1660 = vmatpush2.xpose.msra.mxu0 0.0
    %1661 = vmatprep.subr.mxu0 0.0
    %1662 = vmatpush2.xpose.msra.mxu0 0.0
    %1663 = vmatprep.mubr.f32.mxu0 0.0
    %1664 = vmatmul.mubr.f32.gmra.mxu0 %v1595
    %v1665 = vpop.f32.mrf.mxu0
    %v1666 = vadd.f32 0.0, %v1665
    %v1667 = vpop.f32.mrf.mxu0
    %1668 = vdwg.mxu0
    %v1669 = vsel %vm274, %v1588, -inf
    %1670 = vmax.xlane.f32.xlu0 %v1669
    %v1671 = vpop.xlane.xlu0 %1670
    %v1672 = vsel %vm274, %v1666, -inf
    %1673 = vmax.xlane.f32.xlu0 %v1672
    %v1674 = vpop.xlane.xlu0 %1673
    %v1675 = vsub.f32 %v1588, %v1671
    %v1676 = vsub.f32 %v1666, %v1674
    %v1677 = vmul.f32 %v1675, 1.442695
    %v1678 = vpow.pop %v1677
    %v1679 = vmul.f32 %v1676, 1.442695
    %v1680 = vpow.pop %v1679
    %v1681 = vsel %vm274, %v1678, 0.0
    %1682 = vadd.xlane.f32.xlu0 %v1681
    %v1683 = vpop.xlane.xlu0 %1682
    %v1684 = vsel %vm274, %v1680, 0.0
    %1685 = vadd.xlane.f32.xlu0 %v1684
    %v1686 = vpop.xlane.xlu0 %1685
    %v1687 = vrcp.pop %v1683
    %v1688 = vrcp.pop %v1686
    %v1689 = vmul.f32 %v1678, %v1687
    %v1690 = vmul.f32 %v1680, %v1688
    %1691 = vrot.lane.b32.xlu0 %v250, 40
    %v1692 = vpop.permute.xlu0 %1691
    %v1695 = vsel %vm274, %v1689, 0
    %1697 = vmatprep.subr.mxu0 0.0
    %1698 = vmatpush1.msra.mxu0 0.0
    %1699 = vmatprep.subr.mxu0 0.0
    %1700 = vmatpush1.msra.mxu0 0.0
    %1701 = vmatprep.subr.mxu0 0.0
    %1702 = vmatpush1.msra.mxu0 0.0
    %1703 = vmatprep.subr.mxu0 0.0
    %1704 = vmatpush1.msra.mxu0 0.0
    %1705 = vmatprep.subr.mxu0 0.0
    %1706 = vmatpush1.msra.mxu0 0.0
    %1707 = vmatprep.subr.mxu0 0.0
    %1708 = vmatpush1.msra.mxu0 0.0
    %1709 = vmatprep.subr.mxu0 0.0
    %1710 = vmatpush1.msra.mxu0 0.0
    %1711 = vmatprep.subr.mxu0 0.0
    %1712 = vmatpush1.msra.mxu0 0.0
    %1713 = vmatprep.subr.mxu0 0.0
    %1714 = vmatpush1.msra.mxu0 0.0
    %1715 = vmatprep.subr.mxu0 0.0
    %1716 = vmatpush1.msra.mxu0 0.0
    %1717 = vmatprep.subr.mxu0 0.0
    %1718 = vmatpush1.msra.mxu0 0.0
    %1719 = vmatprep.subr.mxu0 0.0
    %1720 = vmatpush1.msra.mxu0 0.0
    %1721 = vmatprep.subr.mxu0 0.0
    %1722 = vmatpush1.msra.mxu0 0.0
    %1723 = vmatprep.subr.mxu0 0.0
    %1724 = vmatpush1.msra.mxu0 0.0
    %1725 = vmatprep.subr.mxu0 0.0
    %1726 = vmatpush1.msra.mxu0 0.0
    %1727 = vmatprep.subr.mxu0 0.0
    %1728 = vmatpush1.msra.mxu0 %v1692
    %1729 = vmatprep.subr.mxu0 0.0
    %1730 = vmatpush2.msra.mxu0 0.0
    %1731 = vmatprep.subr.mxu0 0.0
    %1732 = vmatpush2.msra.mxu0 0.0
    %1733 = vmatprep.subr.mxu0 0.0
    %1734 = vmatpush2.msra.mxu0 0.0
    %1735 = vmatprep.subr.mxu0 0.0
    %1736 = vmatpush2.msra.mxu0 0.0
    %1737 = vmatprep.subr.mxu0 0.0
    %1738 = vmatpush2.msra.mxu0 0.0
    %1739 = vmatprep.subr.mxu0 0.0
    %1740 = vmatpush2.msra.mxu0 0.0
    %1741 = vmatprep.subr.mxu0 0.0
    %1742 = vmatpush2.msra.mxu0 0.0
    %1743 = vmatprep.subr.mxu0 0.0
    %1744 = vmatpush2.msra.mxu0 0.0
    %1745 = vmatprep.subr.mxu0 0.0
    %1746 = vmatpush2.msra.mxu0 0.0
    %1747 = vmatprep.subr.mxu0 0.0
    %1748 = vmatpush2.msra.mxu0 0.0
    %1749 = vmatprep.subr.mxu0 0.0
    %1750 = vmatpush2.msra.mxu0 0.0
    %1751 = vmatprep.subr.mxu0 0.0
    %1752 = vmatpush2.msra.mxu0 0.0
    %1753 = vmatprep.subr.mxu0 0.0
    %1754 = vmatpush2.msra.mxu0 0.0
    %1755 = vmatprep.subr.mxu0 0.0
    %1756 = vmatpush2.msra.mxu0 0.0
    %1757 = vmatprep.subr.mxu0 0.0
    %1758 = vmatpush2.msra.mxu0 0.0
    %1759 = vmatprep.subr.mxu0 0.0
    %1760 = vmatpush2.msra.mxu0 0.0
    %1761 = vmatprep.mubr.f32.mxu0 0.0
    %1762 = vmatmul.mubr.f32.gmra.mxu0 %v1695
    %v1763 = vpop.f32.mrf.mxu0
    %v1764 = vadd.f32 0.0, %v1763
    %v1765 = vpop.f32.mrf.mxu0
    %1766 = vdwg.mxu0
    %1767 = vrot.lane.b32.xlu0 %v255, 40
    %v1768 = vpop.permute.xlu0 %1767
    %v1771 = vsel %vm274, %v1690, 0
    %1773 = vmatprep.subr.mxu0 0.0
    %1774 = vmatpush1.msra.mxu0 0.0
    %1775 = vmatprep.subr.mxu0 0.0
    %1776 = vmatpush1.msra.mxu0 0.0
    %1777 = vmatprep.subr.mxu0 0.0
    %1778 = vmatpush1.msra.mxu0 0.0
    %1779 = vmatprep.subr.mxu0 0.0
    %1780 = vmatpush1.msra.mxu0 0.0
    %1781 = vmatprep.subr.mxu0 0.0
    %1782 = vmatpush1.msra.mxu0 0.0
    %1783 = vmatprep.subr.mxu0 0.0
    %1784 = vmatpush1.msra.mxu0 0.0
    %1785 = vmatprep.subr.mxu0 0.0
    %1786 = vmatpush1.msra.mxu0 0.0
    %1787 = vmatprep.subr.mxu0 0.0
    %1788 = vmatpush1.msra.mxu0 0.0
    %1789 = vmatprep.subr.mxu0 0.0
    %1790 = vmatpush1.msra.mxu0 0.0
    %1791 = vmatprep.subr.mxu0 0.0
    %1792 = vmatpush1.msra.mxu0 0.0
    %1793 = vmatprep.subr.mxu0 0.0
    %1794 = vmatpush1.msra.mxu0 0.0
    %1795 = vmatprep.subr.mxu0 0.0
    %1796 = vmatpush1.msra.mxu0 0.0
    %1797 = vmatprep.subr.mxu0 0.0
    %1798 = vmatpush1.msra.mxu0 0.0
    %1799 = vmatprep.subr.mxu0 0.0
    %1800 = vmatpush1.msra.mxu0 0.0
    %1801 = vmatprep.subr.mxu0 0.0
    %1802 = vmatpush1.msra.mxu0 0.0
    %1803 = vmatprep.subr.mxu0 0.0
    %1804 = vmatpush1.msra.mxu0 %v1768
    %1805 = vmatprep.subr.mxu0 0.0
    %1806 = vmatpush2.msra.mxu0 0.0
    %1807 = vmatprep.subr.mxu0 0.0
    %1808 = vmatpush2.msra.mxu0 0.0
    %1809 = vmatprep.subr.mxu0 0.0
    %1810 = vmatpush2.msra.mxu0 0.0
    %1811 = vmatprep.subr.mxu0 0.0
    %1812 = vmatpush2.msra.mxu0 0.0
    %1813 = vmatprep.subr.mxu0 0.0
    %1814 = vmatpush2.msra.mxu0 0.0
    %1815 = vmatprep.subr.mxu0 0.0
    %1816 = vmatpush2.msra.mxu0 0.0
    %1817 = vmatprep.subr.mxu0 0.0
    %1818 = vmatpush2.msra.mxu0 0.0
    %1819 = vmatprep.subr.mxu0 0.0
    %1820 = vmatpush2.msra.mxu0 0.0
    %1821 = vmatprep.subr.mxu0 0.0
    %1822 = vmatpush2.msra.mxu0 0.0
    %1823 = vmatprep.subr.mxu0 0.0
    %1824 = vmatpush2.msra.mxu0 0.0
    %1825 = vmatprep.subr.mxu0 0.0
    %1826 = vmatpush2.msra.mxu0 0.0
    %1827 = vmatprep.subr.mxu0 0.0
    %1828 = vmatpush2.msra.mxu0 0.0
    %1829 = vmatprep.subr.mxu0 0.0
    %1830 = vmatpush2.msra.mxu0 0.0
    %1831 = vmatprep.subr.mxu0 0.0
    %1832 = vmatpush2.msra.mxu0 0.0
    %1833 = vmatprep.subr.mxu0 0.0
    %1834 = vmatpush2.msra.mxu0 0.0
    %1835 = vmatprep.subr.mxu0 0.0
    %1836 = vmatpush2.msra.mxu0 0.0
    %1837 = vmatprep.mubr.f32.mxu0 0.0
    %1838 = vmatmul.mubr.f32.gmra.mxu0 %v1771
    %v1839 = vpop.f32.mrf.mxu0
    %v1840 = vadd.f32 0.0, %v1839
    %v1841 = vpop.f32.mrf.mxu0
    %1842 = vdwg.mxu0
    %v1844 = vsel %vm274, %v1764, 0
    %v1847 = vsel %vm274, %v1840, 0
    %1849 = vmatprep.subr.mxu0 0.0
    %1850 = vmatpush1.msra.mxu0 0.0
    %1851 = vmatprep.subr.mxu0 0.0
    %1852 = vmatpush1.msra.mxu0 0.0
    %1853 = vmatprep.subr.mxu0 0.0
    %1854 = vmatpush1.msra.mxu0 0.0
    %1855 = vmatprep.subr.mxu0 0.0
    %1856 = vmatpush1.msra.mxu0 0.0
    %1857 = vmatprep.subr.mxu0 0.0
    %1858 = vmatpush1.msra.mxu0 0.0
    %1859 = vmatprep.subr.mxu0 0.0
    %1860 = vmatpush1.msra.mxu0 0.0
    %1861 = vmatprep.subr.mxu0 0.0
    %1862 = vmatpush1.msra.mxu0 0.0
    %1863 = vmatprep.subr.mxu0 0.0
    %1864 = vmatpush1.msra.mxu0 0.0
    %1865 = vmatprep.subr.mxu0 0.0
    %1866 = vmatpush1.msra.mxu0 0.0
    %1867 = vmatprep.subr.mxu0 0.0
    %1868 = vmatpush1.msra.mxu0 0.0
    %1869 = vmatprep.subr.mxu0 0.0
    %1870 = vmatpush1.msra.mxu0 0.0
    %1871 = vmatprep.subr.mxu0 0.0
    %1872 = vmatpush1.msra.mxu0 0.0
    %1873 = vmatprep.subr.mxu0 0.0
    %1874 = vmatpush1.msra.mxu0 0.0
    %1875 = vmatprep.subr.mxu0 0.0
    %1876 = vmatpush1.msra.mxu0 0.0
    %1877 = vmatprep.subr.mxu0 0.0
    %1878 = vmatpush1.msra.mxu0 0.0
    %1879 = vmatprep.subr.mxu0 0.0
    %1880 = vmatpush1.msra.mxu0 %v264
    %1881 = vmatprep.subr.mxu0 0.0
    %1882 = vmatpush2.msra.mxu0 0.0
    %1883 = vmatprep.subr.mxu0 0.0
    %1884 = vmatpush2.msra.mxu0 0.0
    %1885 = vmatprep.subr.mxu0 0.0
    %1886 = vmatpush2.msra.mxu0 0.0
    %1887 = vmatprep.subr.mxu0 0.0
    %1888 = vmatpush2.msra.mxu0 0.0
    %1889 = vmatprep.subr.mxu0 0.0
    %1890 = vmatpush2.msra.mxu0 0.0
    %1891 = vmatprep.subr.mxu0 0.0
    %1892 = vmatpush2.msra.mxu0 0.0
    %1893 = vmatprep.subr.mxu0 0.0
    %1894 = vmatpush2.msra.mxu0 0.0
    %1895 = vmatprep.subr.mxu0 0.0
    %1896 = vmatpush2.msra.mxu0 0.0
    %1897 = vmatprep.subr.mxu0 0.0
    %1898 = vmatpush2.msra.mxu0 0.0
    %1899 = vmatprep.subr.mxu0 0.0
    %1900 = vmatpush2.msra.mxu0 0.0
    %1901 = vmatprep.subr.mxu0 0.0
    %1902 = vmatpush2.msra.mxu0 0.0
    %1903 = vmatprep.subr.mxu0 0.0
    %1904 = vmatpush2.msra.mxu0 0.0
    %1905 = vmatprep.subr.mxu0 0.0
    %1906 = vmatpush2.msra.mxu0 0.0
    %1907 = vmatprep.subr.mxu0 0.0
    %1908 = vmatpush2.msra.mxu0 0.0
    %1909 = vmatprep.subr.mxu0 0.0
    %1910 = vmatpush2.msra.mxu0 0.0
    %1911 = vmatprep.subr.mxu0 0.0
    %1912 = vmatpush2.msra.mxu0 0.0
    %1913 = vmatprep.mubr.f32.mxu0 0.0
    %1914 = vmatmul.mubr.f32.gmra.mxu0 %v1844
    %v1915 = vpop.f32.mrf.mxu0
    %v1916 = vadd.f32 0.0, %v1915
    %v1917 = vpop.f32.mrf.mxu0
    %1918 = vmatprep.mubr.f32.mxu0 0.0
    %1919 = vmatmul.mubr.f32.gmra.mxu0 %v1847
    %v1920 = vpop.f32.mrf.mxu0
    %v1921 = vadd.f32 0.0, %v1920
    %v1922 = vpop.f32.mrf.mxu0
    %1923 = vdwg.mxu0
    %v1924 = vadd.f32 %v1511, %v1916
    %v1925 = vadd.f32 %v1512, %v1921
    %v1926 = vsel %vm37, %v1924, 0.0
    %1927 = vadd.xlane.f32.xlu0 %v1926
    %v1928 = vpop.xlane.xlu0 %1927
    %v1929 = vsel %vm37, %v1925, 0.0
    %1930 = vadd.xlane.f32.xlu0 %v1929
    %v1931 = vpop.xlane.xlu0 %1930
    %v1932 = vmul.f32 %v1928, %v56
    %v1933 = vmul.f32 %v1931, %v56
    %v1934 = vsub.f32 %v1924, %v1932
    %v1935 = vsub.f32 %v1925, %v1933
    %v1936 = vmul.f32 %v1934, %v1934
    %v1937 = vmul.f32 %v1935, %v1935
    %v1938 = vsel %vm37, %v1936, 0.0
    %1939 = vadd.xlane.f32.xlu0 %v1938
    %v1940 = vpop.xlane.xlu0 %1939
    %v1941 = vsel %vm37, %v1937, 0.0
    %1942 = vadd.xlane.f32.xlu0 %v1941
    %v1943 = vpop.xlane.xlu0 %1942
    %v1944 = vmul.f32 %v1940, %v56
    %v1945 = vmul.f32 %v1943, %v56
    %v1946 = vadd.f32 %v1944, 1e-05
    %v1947 = vadd.f32 %v1945, 1e-05
    %v1948 = vrsqrt.pop %v1946
    %v1949 = vrsqrt.pop %v1947
    %v1950 = vmul.f32 %v1934, %v1948
    %v1951 = vmul.f32 %v1935, %v1949
    %v1952 = vlaneseq
    %v1953 = vshrl.u32 %v1952, 7
    %v1954 = vsub.s32 3, %v1953
    %v1955 = vrot.slane %v29, %v1954
    %v1956 = vmul.f32 %v1950, %v1955
    %v1957 = vmul.f32 %v1951, %v1955
    %v1958 = vlaneseq
    %v1959 = vshrl.u32 %v1958, 7
    %v1960 = vsub.s32 4, %v1959
    %v1961 = vrot.slane %v29, %v1960
    %v1962 = vadd.f32 %v1956, %v1961
    %v1963 = vadd.f32 %v1957, %v1961
    %s1964 = scalar_lea.vmem [#allocation2], 64
    %v1965 = vld [vmem:[%s1964] sm:$0xff]
    %v1966 = vld [vmem:[%s1964 + $0x8] sm:$0xff]
    %v1967 = vld [vmem:[%s1964 + $0x10] sm:$0xff]
    %v1968 = vld [vmem:[%s1964 + $0x18] sm:$0xff]
    %s1969 = scalar_lea.vmem [#allocation2], 96
    %v1970 = vld [vmem:[%s1969] sm:$0xff]
    %v1971 = vld [vmem:[%s1969 + $0x8] sm:$0xff]
    %v1972 = vld [vmem:[%s1969 + $0x10] sm:$0xff]
    %v1973 = vld [vmem:[%s1969 + $0x18] sm:$0xff]
    %v1974 = vlaneseq
    %v1975 = vshrl.u32 %v1974, 7
    %v1976 = vsub.s32 0, %v1975
    %v1977 = vrot.slane %v30, %v1976
    %v1979 = vsel %vm37, %v1962, 0
    %v1982 = vsel %vm37, %v1963, 0
    %1984 = vmatprep.subr.mxu0 0.0
    %1985 = vmatpush1.msra.mxu0 0.0
    %1986 = vmatprep.subr.mxu0 0.0
    %1987 = vmatpush1.msra.mxu0 0.0
    %1988 = vmatprep.subr.mxu0 0.0
    %1989 = vmatpush1.msra.mxu0 0.0
    %1990 = vmatprep.subr.mxu0 0.0
    %1991 = vmatpush1.msra.mxu0 0.0
    %1992 = vmatprep.subr.mxu0 0.0
    %1993 = vmatpush1.msra.mxu0 0.0
    %1994 = vmatprep.subr.mxu0 0.0
    %1995 = vmatpush1.msra.mxu0 0.0
    %1996 = vmatprep.subr.mxu0 0.0
    %1997 = vmatpush1.msra.mxu0 0.0
    %1998 = vmatprep.subr.mxu0 0.0
    %1999 = vmatpush1.msra.mxu0 0.0
    %2000 = vmatprep.subr.mxu0 0.0
    %2001 = vmatpush1.msra.mxu0 0.0
    %2002 = vmatprep.subr.mxu0 0.0
    %2003 = vmatpush1.msra.mxu0 0.0
    %2004 = vmatprep.subr.mxu0 0.0
    %2005 = vmatpush1.msra.mxu0 0.0
    %2006 = vmatprep.subr.mxu0 0.0
    %2007 = vmatpush1.msra.mxu0 0.0
    %2008 = vmatprep.subr.mxu0 0.0
    %2009 = vmatpush1.msra.mxu0 %v1968
    %2010 = vmatprep.subr.mxu0 0.0
    %2011 = vmatpush1.msra.mxu0 %v1967
    %2012 = vmatprep.subr.mxu0 0.0
    %2013 = vmatpush1.msra.mxu0 %v1966
    %2014 = vmatprep.subr.mxu0 0.0
    %2015 = vmatpush1.msra.mxu0 %v1965
    %2016 = vmatprep.subr.mxu0 0.0
    %2017 = vmatpush2.msra.mxu0 0.0
    %2018 = vmatprep.subr.mxu0 0.0
    %2019 = vmatpush2.msra.mxu0 0.0
    %2020 = vmatprep.subr.mxu0 0.0
    %2021 = vmatpush2.msra.mxu0 0.0
    %2022 = vmatprep.subr.mxu0 0.0
    %2023 = vmatpush2.msra.mxu0 0.0
    %2024 = vmatprep.subr.mxu0 0.0
    %2025 = vmatpush2.msra.mxu0 0.0
    %2026 = vmatprep.subr.mxu0 0.0
    %2027 = vmatpush2.msra.mxu0 0.0
    %2028 = vmatprep.subr.mxu0 0.0
    %2029 = vmatpush2.msra.mxu0 0.0
    %2030 = vmatprep.subr.mxu0 0.0
    %2031 = vmatpush2.msra.mxu0 0.0
    %2032 = vmatprep.subr.mxu0 0.0
    %2033 = vmatpush2.msra.mxu0 0.0
    %2034 = vmatprep.subr.mxu0 0.0
    %2035 = vmatpush2.msra.mxu0 0.0
    %2036 = vmatprep.subr.mxu0 0.0
    %2037 = vmatpush2.msra.mxu0 0.0
    %2038 = vmatprep.subr.mxu0 0.0
    %2039 = vmatpush2.msra.mxu0 0.0
    %2040 = vmatprep.subr.mxu0 0.0
    %2041 = vmatpush2.msra.mxu0 0.0
    %2042 = vmatprep.subr.mxu0 0.0
    %2043 = vmatpush2.msra.mxu0 0.0
    %2044 = vmatprep.subr.mxu0 0.0
    %2045 = vmatpush2.msra.mxu0 0.0
    %2046 = vmatprep.subr.mxu0 0.0
    %2047 = vmatpush2.msra.mxu0 0.0
    %2048 = vmatprep.mubr.f32.mxu0 0.0
    %2049 = vmatmul.mubr.f32.gmra.mxu0 %v1979
    %v2050 = vpop.f32.mrf.mxu0
    %v2051 = vadd.f32 %v1977, %v2050
    %v2052 = vpop.f32.mrf.mxu0
    %2053 = vmatprep.mubr.f32.mxu0 0.0
    %2054 = vmatmul.mubr.f32.gmra.mxu0 %v1982
    %v2055 = vpop.f32.mrf.mxu0
    %v2056 = vadd.f32 %v1977, %v2055
    %v2057 = vpop.f32.mrf.mxu0
    %2058 = vdwg.mxu0
    %v2059 = vmax.f32 %v2051, 0.0
    %v2060 = vmax.f32 %v2056, 0.0
    %v2061 = vlaneseq
    %v2062 = vshrl.u32 %v2061, 7
    %v2063 = vsub.s32 1, %v2062
    %v2064 = vrot.slane %v30, %v2063
    %vm2065 = vcmask 523264
    %v2067 = vsel %vm2065, %v2059, 0
    %v2070 = vsel %vm2065, %v2060, 0
    %v2073 = vsel %vm2065, %v1970, 0
    %v2076 = vsel %vm2065, %v1971, 0
    %v2079 = vsel %vm2065, %v1972, 0
    %v2082 = vsel %vm2065, %v1973, 0
    %2084 = vmatprep.subr.mxu0 0.0
    %2085 = vmatpush1.xpose.msra.mxu0 0.0
    %2086 = vmatprep.subr.mxu0 0.0
    %2087 = vmatpush1.xpose.msra.mxu0 0.0
    %2088 = vmatprep.subr.mxu0 0.0
    %2089 = vmatpush1.xpose.msra.mxu0 0.0
    %2090 = vmatprep.subr.mxu0 0.0
    %2091 = vmatpush1.xpose.msra.mxu0 0.0
    %2092 = vmatprep.subr.mxu0 0.0
    %2093 = vmatpush1.xpose.msra.mxu0 0.0
    %2094 = vmatprep.subr.mxu0 0.0
    %2095 = vmatpush1.xpose.msra.mxu0 0.0
    %2096 = vmatprep.subr.mxu0 0.0
    %2097 = vmatpush1.xpose.msra.mxu0 0.0
    %2098 = vmatprep.subr.mxu0 0.0
    %2099 = vmatpush1.xpose.msra.mxu0 0.0
    %2100 = vmatprep.subr.mxu0 0.0
    %2101 = vmatpush1.xpose.msra.mxu0 0.0
    %2102 = vmatprep.subr.mxu0 0.0
    %2103 = vmatpush1.xpose.msra.mxu0 0.0
    %2104 = vmatprep.subr.mxu0 0.0
    %2105 = vmatpush1.xpose.msra.mxu0 0.0
    %2106 = vmatprep.subr.mxu0 0.0
    %2107 = vmatpush1.xpose.msra.mxu0 0.0
    %2108 = vmatprep.subr.mxu0 0.0
    %2109 = vmatpush1.xpose.msra.mxu0 %v2082
    %2110 = vmatprep.subr.mxu0 0.0
    %2111 = vmatpush1.xpose.msra.mxu0 %v2079
    %2112 = vmatprep.subr.mxu0 0.0
    %2113 = vmatpush1.xpose.msra.mxu0 %v2076
    %2114 = vmatprep.subr.mxu0 0.0
    %2115 = vmatpush1.xpose.msra.mxu0 %v2073
    %2116 = vmatprep.subr.mxu0 0.0
    %2117 = vmatpush2.xpose.msra.mxu0 0.0
    %2118 = vmatprep.subr.mxu0 0.0
    %2119 = vmatpush2.xpose.msra.mxu0 0.0
    %2120 = vmatprep.subr.mxu0 0.0
    %2121 = vmatpush2.xpose.msra.mxu0 0.0
    %2122 = vmatprep.subr.mxu0 0.0
    %2123 = vmatpush2.xpose.msra.mxu0 0.0
    %2124 = vmatprep.subr.mxu0 0.0
    %2125 = vmatpush2.xpose.msra.mxu0 0.0
    %2126 = vmatprep.subr.mxu0 0.0
    %2127 = vmatpush2.xpose.msra.mxu0 0.0
    %2128 = vmatprep.subr.mxu0 0.0
    %2129 = vmatpush2.xpose.msra.mxu0 0.0
    %2130 = vmatprep.subr.mxu0 0.0
    %2131 = vmatpush2.xpose.msra.mxu0 0.0
    %2132 = vmatprep.subr.mxu0 0.0
    %2133 = vmatpush2.xpose.msra.mxu0 0.0
    %2134 = vmatprep.subr.mxu0 0.0
    %2135 = vmatpush2.xpose.msra.mxu0 0.0
    %2136 = vmatprep.subr.mxu0 0.0
    %2137 = vmatpush2.xpose.msra.mxu0 0.0
    %2138 = vmatprep.subr.mxu0 0.0
    %2139 = vmatpush2.xpose.msra.mxu0 0.0
    %2140 = vmatprep.subr.mxu0 0.0
    %2141 = vmatpush2.xpose.msra.mxu0 0.0
    %2142 = vmatprep.subr.mxu0 0.0
    %2143 = vmatpush2.xpose.msra.mxu0 0.0
    %2144 = vmatprep.subr.mxu0 0.0
    %2145 = vmatpush2.xpose.msra.mxu0 0.0
    %2146 = vmatprep.subr.mxu0 0.0
    %2147 = vmatpush2.xpose.msra.mxu0 0.0
    %2148 = vmatprep.mubr.f32.mxu0 0.0
    %2149 = vmatmul.mubr.f32.gmra.mxu0 %v2067
    %v2150 = vpop.f32.mrf.mxu0
    %v2151 = vadd.f32 %v2064, %v2150
    %v2152 = vpop.f32.mrf.mxu0
    %2153 = vmatprep.mubr.f32.mxu0 0.0
    %2154 = vmatmul.mubr.f32.gmra.mxu0 %v2070
    %v2155 = vpop.f32.mrf.mxu0
    %v2156 = vadd.f32 %v2064, %v2155
    %v2157 = vpop.f32.mrf.mxu0
    %2158 = vdwg.mxu0
    %v2159 = vadd.f32 %v1962, %v2151
    %v2160 = vadd.f32 %v1963, %v2156
    %v2161 = vsel %vm37, %v2159, 0.0
    %2162 = vadd.xlane.f32.xlu0 %v2161
    %v2163 = vpop.xlane.xlu0 %2162
    %v2164 = vsel %vm37, %v2160, 0.0
    %2165 = vadd.xlane.f32.xlu0 %v2164
    %v2166 = vpop.xlane.xlu0 %2165
    %v2167 = vmul.f32 %v2163, %v56
    %v2168 = vmul.f32 %v2166, %v56
    %v2169 = vsub.f32 %v2159, %v2167
    %v2170 = vsub.f32 %v2160, %v2168
    %v2171 = vmul.f32 %v2169, %v2169
    %v2172 = vmul.f32 %v2170, %v2170
    %v2173 = vsel %vm37, %v2171, 0.0
    %2174 = vadd.xlane.f32.xlu0 %v2173
    %v2175 = vpop.xlane.xlu0 %2174
    %v2176 = vsel %vm37, %v2172, 0.0
    %2177 = vadd.xlane.f32.xlu0 %v2176
    %v2178 = vpop.xlane.xlu0 %2177
    %v2179 = vmul.f32 %v2175, %v56
    %v2180 = vmul.f32 %v2178, %v56
    %v2181 = vadd.f32 %v2179, 1e-05
    %v2182 = vadd.f32 %v2180, 1e-05
    %v2183 = vrsqrt.pop %v2181
    %v2184 = vrsqrt.pop %v2182
    %v2185 = vmul.f32 %v2169, %v2183
    %v2186 = vmul.f32 %v2170, %v2184
    %v2187 = vlaneseq
    %v2188 = vshrl.u32 %v2187, 7
    %v2189 = vsub.s32 5, %v2188
    %v2190 = vrot.slane %v29, %v2189
    %v2191 = vmul.f32 %v2185, %v2190
    %v2192 = vmul.f32 %v2186, %v2190
    %v2193 = vlaneseq
    %v2194 = vshrl.u32 %v2193, 7
    %v2195 = vsub.s32 6, %v2194
    %v2196 = vrot.slane %v29, %v2195
    %v2197 = vadd.f32 %v2191, %v2196
    %v2198 = vadd.f32 %v2192, %v2196
    %2199 = vst.msk [vmem:[#allocation5] sm:$0xff] %vm37, %v2197
    %2200 = vst.msk [vmem:[#allocation5 + $0x8] sm:$0xff] %vm37, %v2198
    // Predicated region
    $region18: #{tpu_custom_call.1} parent=1 // pred_check
      _
    $region19: #{tpu_custom_call.1} parent=1 // pred_check_branch
      %2202 = sbr.rel (0) target = $region21
    $region20: #{tpu_custom_call.1} parent=1 // pred_region
      %s2204 = ssub.s32 256, 256
      %2205 = vsyncadd [#allocation4], %s2204
      %s2206 = sshll.u32 [#allocation5], 4
      %s2207 = int_to_ptr.vmem [resolvable:$true] %s2206
      %2212 = dma.vmem_to_hbm [thread:$0]  %s2207, 256, %s3, [#allocation4], 128, 128, 8
    $region21: #{tpu_custom_call.1} parent=1 // pred_fallthru
      _
    // Predicated region
    $region22: #{tpu_custom_call.1} parent=1 // pred_check
      _
    $region23: #{tpu_custom_call.1} parent=1 // pred_check_branch
      %2214 = sbr.rel (0) target = $region25
    $region24: #{tpu_custom_call.1} parent=1 // pred_region
      %2215 = dma.done [#allocation4], 256
    $region25: #{tpu_custom_call.1} parent=1 // pred_fallthru
      _
    %2216 = vsyncpa [#allocation3], 1
    %2217 = vsyncpa [#allocation4], 1

</llo_original>
